<compile_context>
chip_gen: v7x
topology: tpu7x:2x2x1
jax: 0.10.0
libtpu: 0.0.40
codegen_flags: <defaults>
</compile_context>

<pallas_src>
import functools
import math

import jax
import jax.numpy as jnp
from jax import lax
from jax.experimental import pallas as pl
from jax.experimental.pallas import tpu as pltpu


def _rot6d_component_builders(x, y, z):
    """Shared Rodrigues terms + lazy builders for the 6 rot6d components.

    Returns 6 zero-arg lambdas producing R00, R01, R02, R10, R11, R12 so the
    caller can interleave production with consumption (fewer live temporaries).
    """
    xx, yy, zz = x * x, y * y, z * z
    sq = xx + yy + zz                               # theta^2
    small = sq < 1e-8                               # angle < 1e-4
    safe_sq = jnp.where(small, 1.0, sq)
    inv_angle = lax.rsqrt(safe_sq)                  # 1/theta   (single EUP op)
    angle = sq * inv_angle                          # theta
    inv_sq = inv_angle * inv_angle                  # 1/theta^2
    sinc = jnp.where(small, 1.0 - sq * (1.0 / 6.0),
                     jnp.sin(angle) * inv_angle)                # sin(t)/t
    cosc = jnp.where(small, 0.5 - sq * (1.0 / 24.0),
                     (1.0 - jnp.cos(angle)) * inv_sq)           # (1-cos(t))/t^2
    sx, sy, sz = sinc * x, sinc * y, sinc * z
    cxy = cosc * (x * y)
    return (
        lambda: 1.0 - cosc * (yy + zz),    # R00
        lambda: cxy - sz,                  # R01
        lambda: cosc * (x * z) + sy,       # R02
        lambda: cxy + sz,                  # R10
        lambda: 1.0 - cosc * (xx + zz),    # R11
        lambda: cosc * (y * z) - sx,       # R12
    )


def _smooth_joint_kernel(theta_ref, prev_ref, out_ref, *, loss_weight, angle_scale):
    # theta_ref: (3, J, TB)  x/y/z planes; joints on sublanes, frames on lanes.
    # prev_ref : (3, J, 128) the 128-frame slab ending just before this block
    #            (same HBM array, different BlockSpec view); its lane 127 is
    #            the "previous frame" of this block's lane 0.
    # out_ref  : (1, TB)     per-frame loss, lane-dense.
    tb = theta_ref.shape[2]

    x = theta_ref[0]                                 # (J, TB)
    y = theta_ref[1]
    z = theta_ref[2]
    bx = prev_ref[0, :, 127:128]                     # (J, 1)
    by = prev_ref[1, :, 127:128]
    bz = prev_ref[2, :, 127:128]
    if angle_scale != 1.0:                           # deg2rad folded in-kernel
        x, y, z = x * angle_scale, y * angle_scale, z * angle_scale
        bx, by, bz = bx * angle_scale, by * angle_scale, bz * angle_scale

    comps = _rot6d_component_builders(x, y, z)       # 6 lazy (J, TB) builders
    bcomps = _rot6d_component_builders(bx, by, bz)   # 6 lazy (J, 1) builders

    diff = None                                      # (J, TB)
    diff0 = None                                     # (J, 1) block-boundary diff
    for c_fn, bc_fn in zip(comps, bcomps):
        rc = c_fn()                                  # produce one component
        rolled = pltpu.roll(rc, shift=1, axis=1)     # r[t-1] at lane t (XLU slot)
        d = jnp.abs(rc - rolled)
        d0 = jnp.abs(rc[:, 0:1] - bc_fn())
        diff = d if diff is None else diff + d       # consume immediately
        diff0 = d0 if diff0 is None else diff0 + d0

    per_frame = jnp.sum(diff, axis=0, keepdims=True)      # (1, TB) sum over J
    first = jnp.sum(diff0, axis=0, keepdims=True)         # (1, 1)
    first = jnp.where(pl.program_id(0) == 0, 0.0, first)  # frame 0 loss == 0
    lane = lax.broadcasted_iota(jnp.int32, (1, tb), 1)
    per_frame = jnp.where(lane == 0, first, per_frame)    # fix wrap-around lane
    if loss_weight != 1.0:
        per_frame = loss_weight * per_frame
    out_ref[...] = per_frame


def smooth_joint_loss(body_pose, loss_weight=1.0, reduction='mean', degree=False,
                      block_frames=8192):
    """JAX/Pallas equivalent of SmoothJointLoss.forward."""
    assert reduction in (None, 'none', 'mean', 'sum')
    B = body_pose.shape[0]
    theta = jnp.asarray(body_pose, jnp.float32).reshape(B, -1, 3)    # (B, J, 3)
    J = theta.shape[1]

    # Frames -> lanes, joints -> sublanes: the one real data-movement prep op.
    theta_t = jnp.transpose(theta, (2, 1, 0))                        # (3, J, B)

    # ---- tiling: TB frames per block (multiple of 128), ragged last block ---
    tb0 = max(128, min(int(block_frames), 16384))
    tb0 = ((tb0 + 127) // 128) * 128
    G = -(-B // tb0)
    if G == 1 and B > 256:
        G = 2                               # keep both v7x TensorCores busy
    TB = ((-(-B // G) + 127) // 128) * 128
    G = -(-B // TB)                         # no fully-empty trailing block
    bpt = TB // 128                         # 128-lane sub-blocks per tile

    angle_scale = math.pi / 180.0 if degree else 1.0
    kernel = functools.partial(_smooth_joint_kernel,
                               loss_weight=float(loss_weight),
                               angle_scale=float(angle_scale))

    # VMEM budget: double-buffered (3,J,TB) input + prev slab + ~22 live
    # block-sized f32 temporaries; clamp to stay safe on v7x (64 MiB/TC).
    jp = ((J + 7) // 8) * 8
    budget = (2 * 3 * jp * TB * 4           # main input, double buffered
              + 2 * 3 * jp * 128 * 4        # prev slab, double buffered
              + 2 * 4 * TB                  # output, double buffered
              + 22 * jp * TB * 4            # in-kernel temporaries
              + (4 << 20))                  # slack
    vmem_limit = int(min(max(budget, 32 << 20), 56 << 20))

    cost = pl.CostEstimate(
        flops=int(55 * B * J),
        transcendentals=int(3 * B * J),     # rsqrt, sin, cos per element
        bytes_accessed=int(12 * B * J + 4 * B + 12 * J * 128 * G),
    )

    out = pl.pallas_call(
        kernel,
        out_shape=jax.ShapeDtypeStruct((1, B), jnp.float32),
        grid=(G,),
        in_specs=[
            pl.BlockSpec((3, J, TB), lambda i: (0, 0, i)),
            # previous 128-frame slab; lane 127 = frame i*TB - 1 (block 0 for i==0)
            pl.BlockSpec((3, J, 128),
                         lambda i: (0, 0, jnp.maximum(i * bpt - 1, 0))),
        ],
        out_specs=pl.BlockSpec((1, TB), lambda i: (0, i)),
        compiler_params=pltpu.CompilerParams(
            dimension_semantics=("parallel",),
            vmem_limit_bytes=vmem_limit,
        ),
        cost_estimate=cost,
    )(theta_t, theta_t)

    per_frame = out[0]                                # (B,), ragged tail excluded

    if reduction == 'mean':
        return jnp.mean(per_frame)                    # divides by B (zero row included)
    elif reduction == 'sum':
        return jnp.sum(per_frame)
    return per_frame


def _reference(body_pose, loss_weight=1.0, reduction='mean', degree=False):
    """Pure-JAX reference of the PyTorch forward (for correctness check)."""
    B = body_pose.shape[0]
    theta = jnp.asarray(body_pose, jnp.float32).reshape(B, -1, 3)
    if degree:
        theta = jnp.deg2rad(theta)
    sq = jnp.sum(theta * theta, axis=-1)
    angle = jnp.sqrt(sq)
    small = angle < 1e-4
    sa = jnp.where(small, 1.0, angle)
    ssq = jnp.where(small, 1.0, sq)
    sinc = jnp.where(small, 1.0 - sq / 6.0, jnp.sin(sa) / sa)[..., None, None]
    cosc = jnp.where(small, 0.5 - sq / 24.0, (1.0 - jnp.cos(sa)) / ssq)[..., None, None]
    x, y, z = theta[..., 0], theta[..., 1], theta[..., 2]
    zeros = jnp.zeros_like(x)
    K = jnp.stack([
        jnp.stack([zeros, -z, y], -1),
        jnp.stack([z, zeros, -x], -1),
        jnp.stack([-y, x, zeros], -1),
    ], -2)
    R = jnp.eye(3) + sinc * K + cosc * (K @ K)
    rot6d = R[..., :2, :].reshape(*R.shape[:-2], 6)
    diff = jnp.sum(jnp.abs(rot6d[1:] - rot6d[:-1]), axis=-1)
    per_frame = jnp.concatenate([jnp.zeros_like(diff[:1]), diff], axis=0).sum(-1)
    per_frame = loss_weight * per_frame
    if reduction == 'mean':
        return per_frame.mean()
    if reduction == 'sum':
        return per_frame.sum()
    return per_frame


if __name__ == "__main__":
    key = jax.random.PRNGKey(0)
    k1, k2, k3 = jax.random.split(key, 3)

    # Small canonical case: 8 frames, SMPL body pose (23 joints * 3 = 69).
    B, J = 8, 23
    body_pose = jax.random.uniform(k1, (B, J * 3), dtype=jnp.float32,
                                   minval=-1.0, maxval=1.0)
    out = smooth_joint_loss(body_pose, loss_weight=1.0, reduction='mean')
    out = jax.block_until_ready(out)
    ref = _reference(body_pose, loss_weight=1.0, reduction='mean')
    assert jnp.allclose(out, ref, rtol=1e-4, atol=1e-4), (out, ref)

    # Multi-block ragged path: grid tiling + cross-block boundary frames.
    B2 = 200
    body_pose2 = jax.random.uniform(k2, (B2, J * 3), dtype=jnp.float32,
                                    minval=-1.0, maxval=1.0)
    out2 = smooth_joint_loss(body_pose2, loss_weight=2.0, reduction='none',
                             block_frames=128)
    out2 = jax.block_until_ready(out2)
    ref2 = _reference(body_pose2, loss_weight=2.0, reduction='none')
    assert jnp.allclose(out2, ref2, rtol=1e-4, atol=1e-4)

    # Degree input + sum reduction (deg2rad folded into the kernel).
    body_pose3 = jax.random.uniform(k3, (16, J * 3), dtype=jnp.float32,
                                    minval=-60.0, maxval=60.0)
    out3 = smooth_joint_loss(body_pose3, loss_weight=0.5, reduction='sum',
                             degree=True)
    out3 = jax.block_until_ready(out3)
    ref3 = _reference(body_pose3, loss_weight=0.5, reduction='sum', degree=True)
    assert jnp.allclose(out3, ref3, rtol=1e-4, atol=1e-4), (out3, ref3)

    print("KERNEL_OK")
</pallas_src>

<mosaic_0001>
module attributes {stable_mosaic.version = 11 : i64} {
  func.func @_smooth_joint_kernel(%arg0: i32, %arg1: memref<3x23x128xf32, #tpu.memory_space<vmem>>, %arg2: memref<3x23x128xf32, #tpu.memory_space<vmem>>, %arg3: memref<1x128xf32, #tpu.memory_space<vmem>>) attributes {dimension_semantics = [#tpu.dimension_semantics<parallel>], iteration_bounds = array<i64: 1>, scalar_prefetch = 0 : i64, scratch_operands = 0 : i64, tpu.core_type = #tpu.core_type<tc>, window_params = [{transform_indices = @transform_0, window_bounds = array<i64: 3, 23, 128>}, {transform_indices = @transform_1, window_bounds = array<i64: 3, 23, 128>}, {transform_indices = @transform_2, window_bounds = array<i64: 1, 128>}]} {
    %c0 = arith.constant 0 : index
    %c0_0 = arith.constant 0 : index
    %c0_1 = arith.constant 0 : index
    %0 = vector.load %arg1[%c0, %c0_0, %c0_1] : memref<3x23x128xf32, #tpu.memory_space<vmem>>, vector<1x23x128xf32>
    %1 = vector.shape_cast %0 : vector<1x23x128xf32> to vector<23x128xf32>
    %c1 = arith.constant 1 : index
    %c0_2 = arith.constant 0 : index
    %c0_3 = arith.constant 0 : index
    %2 = vector.load %arg1[%c1, %c0_2, %c0_3] : memref<3x23x128xf32, #tpu.memory_space<vmem>>, vector<1x23x128xf32>
    %3 = vector.shape_cast %2 : vector<1x23x128xf32> to vector<23x128xf32>
    %c2 = arith.constant 2 : index
    %c0_4 = arith.constant 0 : index
    %c0_5 = arith.constant 0 : index
    %4 = vector.load %arg1[%c2, %c0_4, %c0_5] : memref<3x23x128xf32, #tpu.memory_space<vmem>>, vector<1x23x128xf32>
    %5 = vector.shape_cast %4 : vector<1x23x128xf32> to vector<23x128xf32>
    %c0_6 = arith.constant 0 : index
    %c0_7 = arith.constant 0 : index
    %c127 = arith.constant 127 : index
    %6 = vector.load %arg2[%c0_6, %c0_7, %c127] : memref<3x23x128xf32, #tpu.memory_space<vmem>>, vector<1x23x1xf32>
    %7 = vector.shape_cast %6 : vector<1x23x1xf32> to vector<23x1xf32>
    %c1_8 = arith.constant 1 : index
    %c0_9 = arith.constant 0 : index
    %c127_10 = arith.constant 127 : index
    %8 = vector.load %arg2[%c1_8, %c0_9, %c127_10] : memref<3x23x128xf32, #tpu.memory_space<vmem>>, vector<1x23x1xf32>
    %9 = vector.shape_cast %8 : vector<1x23x1xf32> to vector<23x1xf32>
    %c2_11 = arith.constant 2 : index
    %c0_12 = arith.constant 0 : index
    %c127_13 = arith.constant 127 : index
    %10 = vector.load %arg2[%c2_11, %c0_12, %c127_13] : memref<3x23x128xf32, #tpu.memory_space<vmem>>, vector<1x23x1xf32>
    %11 = vector.shape_cast %10 : vector<1x23x1xf32> to vector<23x1xf32>
    %12 = arith.mulf %1, %1 : vector<23x128xf32>
    %13 = arith.mulf %3, %3 : vector<23x128xf32>
    %14 = arith.mulf %5, %5 : vector<23x128xf32>
    %15 = arith.addf %12, %13 : vector<23x128xf32>
    %16 = arith.addf %15, %14 : vector<23x128xf32>
    %cst = arith.constant 9.99999993E-9 : f32
    %17 = vector.broadcast %cst : f32 to vector<23x128xf32>
    %18 = arith.cmpf olt, %16, %17 : vector<23x128xf32>
    %cst_14 = arith.constant 1.000000e+00 : f32
    %19 = vector.broadcast %cst_14 : f32 to vector<23x128xf32>
    %20 = arith.select %18, %19, %16 : vector<23x128xi1>, vector<23x128xf32>
    %21 = math.rsqrt %20 : vector<23x128xf32>
    %22 = arith.mulf %16, %21 : vector<23x128xf32>
    %23 = arith.mulf %21, %21 : vector<23x128xf32>
    %cst_15 = arith.constant 0.166666672 : f32
    %24 = vector.broadcast %cst_15 : f32 to vector<23x128xf32>
    %25 = arith.mulf %16, %24 : vector<23x128xf32>
    %cst_16 = arith.constant 1.000000e+00 : f32
    %26 = vector.broadcast %cst_16 : f32 to vector<23x128xf32>
    %27 = arith.subf %26, %25 : vector<23x128xf32>
    %28 = math.sin %22 : vector<23x128xf32>
    %29 = arith.mulf %28, %21 : vector<23x128xf32>
    %30 = arith.select %18, %27, %29 : vector<23x128xi1>, vector<23x128xf32>
    %cst_17 = arith.constant 0.0416666679 : f32
    %31 = vector.broadcast %cst_17 : f32 to vector<23x128xf32>
    %32 = arith.mulf %16, %31 : vector<23x128xf32>
    %cst_18 = arith.constant 5.000000e-01 : f32
    %33 = vector.broadcast %cst_18 : f32 to vector<23x128xf32>
    %34 = arith.subf %33, %32 : vector<23x128xf32>
    %35 = math.cos %22 : vector<23x128xf32>
    %cst_19 = arith.constant 1.000000e+00 : f32
    %36 = vector.broadcast %cst_19 : f32 to vector<23x128xf32>
    %37 = arith.subf %36, %35 : vector<23x128xf32>
    %38 = arith.mulf %37, %23 : vector<23x128xf32>
    %39 = arith.select %18, %34, %38 : vector<23x128xi1>, vector<23x128xf32>
    %40 = arith.mulf %30, %1 : vector<23x128xf32>
    %41 = arith.mulf %30, %3 : vector<23x128xf32>
    %42 = arith.mulf %30, %5 : vector<23x128xf32>
    %43 = arith.mulf %1, %3 : vector<23x128xf32>
    %44 = arith.mulf %39, %43 : vector<23x128xf32>
    %45 = arith.mulf %7, %7 : vector<23x1xf32>
    %46 = arith.mulf %9, %9 : vector<23x1xf32>
    %47 = arith.mulf %11, %11 : vector<23x1xf32>
    %48 = arith.addf %45, %46 : vector<23x1xf32>
    %49 = arith.addf %48, %47 : vector<23x1xf32>
    %cst_20 = arith.constant 9.99999993E-9 : f32
    %50 = vector.broadcast %cst_20 : f32 to vector<23x1xf32>
    %51 = arith.cmpf olt, %49, %50 : vector<23x1xf32>
    %cst_21 = arith.constant 1.000000e+00 : f32
    %52 = vector.broadcast %cst_21 : f32 to vector<23x1xf32>
    %53 = arith.select %51, %52, %49 : vector<23x1xi1>, vector<23x1xf32>
    %54 = math.rsqrt %53 : vector<23x1xf32>
    %55 = arith.mulf %49, %54 : vector<23x1xf32>
    %56 = arith.mulf %54, %54 : vector<23x1xf32>
    %cst_22 = arith.constant 0.166666672 : f32
    %57 = vector.broadcast %cst_22 : f32 to vector<23x1xf32>
    %58 = arith.mulf %49, %57 : vector<23x1xf32>
    %cst_23 = arith.constant 1.000000e+00 : f32
    %59 = vector.broadcast %cst_23 : f32 to vector<23x1xf32>
    %60 = arith.subf %59, %58 : vector<23x1xf32>
    %61 = math.sin %55 : vector<23x1xf32>
    %62 = arith.mulf %61, %54 : vector<23x1xf32>
    %63 = arith.select %51, %60, %62 : vector<23x1xi1>, vector<23x1xf32>
    %cst_24 = arith.constant 0.0416666679 : f32
    %64 = vector.broadcast %cst_24 : f32 to vector<23x1xf32>
    %65 = arith.mulf %49, %64 : vector<23x1xf32>
    %cst_25 = arith.constant 5.000000e-01 : f32
    %66 = vector.broadcast %cst_25 : f32 to vector<23x1xf32>
    %67 = arith.subf %66, %65 : vector<23x1xf32>
    %68 = math.cos %55 : vector<23x1xf32>
    %cst_26 = arith.constant 1.000000e+00 : f32
    %69 = vector.broadcast %cst_26 : f32 to vector<23x1xf32>
    %70 = arith.subf %69, %68 : vector<23x1xf32>
    %71 = arith.mulf %70, %56 : vector<23x1xf32>
    %72 = arith.select %51, %67, %71 : vector<23x1xi1>, vector<23x1xf32>
    %73 = arith.mulf %63, %7 : vector<23x1xf32>
    %74 = arith.mulf %63, %9 : vector<23x1xf32>
    %75 = arith.mulf %63, %11 : vector<23x1xf32>
    %76 = arith.mulf %7, %9 : vector<23x1xf32>
    %77 = arith.mulf %72, %76 : vector<23x1xf32>
    %78 = arith.addf %13, %14 : vector<23x128xf32>
    %79 = arith.mulf %39, %78 : vector<23x128xf32>
    %cst_27 = arith.constant 1.000000e+00 : f32
    %80 = vector.broadcast %cst_27 : f32 to vector<23x128xf32>
    %81 = arith.subf %80, %79 : vector<23x128xf32>
    %c1_i32 = arith.constant 1 : i32
    %82 = tpu.dynamic_rotate %81 by %c1_i32 dim 1 : vector<23x128xf32>, i32 -> vector<23x128xf32>
    %83 = arith.subf %81, %82 : vector<23x128xf32>
    %84 = math.absf %83 : vector<23x128xf32>
    %85 = vector.extract_strided_slice %81 {offsets = [0, 0], sizes = [23, 1], strides = [1, 1]} : vector<23x128xf32> to vector<23x1xf32>
    %86 = arith.addf %46, %47 : vector<23x1xf32>
    %87 = arith.mulf %72, %86 : vector<23x1xf32>
    %cst_28 = arith.constant 1.000000e+00 : f32
    %88 = vector.broadcast %cst_28 : f32 to vector<23x1xf32>
    %89 = arith.subf %88, %87 : vector<23x1xf32>
    %90 = arith.subf %85, %89 : vector<23x1xf32>
    %91 = math.absf %90 : vector<23x1xf32>
    %92 = arith.subf %44, %42 : vector<23x128xf32>
    %c1_i32_29 = arith.constant 1 : i32
    %93 = tpu.dynamic_rotate %92 by %c1_i32_29 dim 1 : vector<23x128xf32>, i32 -> vector<23x128xf32>
    %94 = arith.subf %92, %93 : vector<23x128xf32>
    %95 = math.absf %94 : vector<23x128xf32>
    %96 = vector.extract_strided_slice %92 {offsets = [0, 0], sizes = [23, 1], strides = [1, 1]} : vector<23x128xf32> to vector<23x1xf32>
    %97 = arith.subf %77, %75 : vector<23x1xf32>
    %98 = arith.subf %96, %97 : vector<23x1xf32>
    %99 = math.absf %98 : vector<23x1xf32>
    %100 = arith.addf %84, %95 : vector<23x128xf32>
    %101 = arith.addf %91, %99 : vector<23x1xf32>
    %102 = arith.mulf %1, %5 : vector<23x128xf32>
    %103 = arith.mulf %39, %102 : vector<23x128xf32>
    %104 = arith.addf %103, %41 : vector<23x128xf32>
    %c1_i32_30 = arith.constant 1 : i32
    %105 = tpu.dynamic_rotate %104 by %c1_i32_30 dim 1 : vector<23x128xf32>, i32 -> vector<23x128xf32>
    %106 = arith.subf %104, %105 : vector<23x128xf32>
    %107 = math.absf %106 : vector<23x128xf32>
    %108 = vector.extract_strided_slice %104 {offsets = [0, 0], sizes = [23, 1], strides = [1, 1]} : vector<23x128xf32> to vector<23x1xf32>
    %109 = arith.mulf %7, %11 : vector<23x1xf32>
    %110 = arith.mulf %72, %109 : vector<23x1xf32>
    %111 = arith.addf %110, %74 : vector<23x1xf32>
    %112 = arith.subf %108, %111 : vector<23x1xf32>
    %113 = math.absf %112 : vector<23x1xf32>
    %114 = arith.addf %100, %107 : vector<23x128xf32>
    %115 = arith.addf %101, %113 : vector<23x1xf32>
    %116 = arith.addf %44, %42 : vector<23x128xf32>
    %c1_i32_31 = arith.constant 1 : i32
    %117 = tpu.dynamic_rotate %116 by %c1_i32_31 dim 1 : vector<23x128xf32>, i32 -> vector<23x128xf32>
    %118 = arith.subf %116, %117 : vector<23x128xf32>
    %119 = math.absf %118 : vector<23x128xf32>
    %120 = vector.extract_strided_slice %116 {offsets = [0, 0], sizes = [23, 1], strides = [1, 1]} : vector<23x128xf32> to vector<23x1xf32>
    %121 = arith.addf %77, %75 : vector<23x1xf32>
    %122 = arith.subf %120, %121 : vector<23x1xf32>
    %123 = math.absf %122 : vector<23x1xf32>
    %124 = arith.addf %114, %119 : vector<23x128xf32>
    %125 = arith.addf %115, %123 : vector<23x1xf32>
    %126 = arith.addf %12, %14 : vector<23x128xf32>
    %127 = arith.mulf %39, %126 : vector<23x128xf32>
    %cst_32 = arith.constant 1.000000e+00 : f32
    %128 = vector.broadcast %cst_32 : f32 to vector<23x128xf32>
    %129 = arith.subf %128, %127 : vector<23x128xf32>
    %c1_i32_33 = arith.constant 1 : i32
    %130 = tpu.dynamic_rotate %129 by %c1_i32_33 dim 1 : vector<23x128xf32>, i32 -> vector<23x128xf32>
    %131 = arith.subf %129, %130 : vector<23x128xf32>
    %132 = math.absf %131 : vector<23x128xf32>
    %133 = vector.extract_strided_slice %129 {offsets = [0, 0], sizes = [23, 1], strides = [1, 1]} : vector<23x128xf32> to vector<23x1xf32>
    %134 = arith.addf %45, %47 : vector<23x1xf32>
    %135 = arith.mulf %72, %134 : vector<23x1xf32>
    %cst_34 = arith.constant 1.000000e+00 : f32
    %136 = vector.broadcast %cst_34 : f32 to vector<23x1xf32>
    %137 = arith.subf %136, %135 : vector<23x1xf32>
    %138 = arith.subf %133, %137 : vector<23x1xf32>
    %139 = math.absf %138 : vector<23x1xf32>
    %140 = arith.addf %124, %132 : vector<23x128xf32>
    %141 = arith.addf %125, %139 : vector<23x1xf32>
    %142 = arith.mulf %3, %5 : vector<23x128xf32>
    %143 = arith.mulf %39, %142 : vector<23x128xf32>
    %144 = arith.subf %143, %40 : vector<23x128xf32>
    %c1_i32_35 = arith.constant 1 : i32
    %145 = tpu.dynamic_rotate %144 by %c1_i32_35 dim 1 : vector<23x128xf32>, i32 -> vector<23x128xf32>
    %146 = arith.subf %144, %145 : vector<23x128xf32>
    %147 = math.absf %146 : vector<23x128xf32>
    %148 = vector.extract_strided_slice %144 {offsets = [0, 0], sizes = [23, 1], strides = [1, 1]} : vector<23x128xf32> to vector<23x1xf32>
    %149 = arith.mulf %9, %11 : vector<23x1xf32>
    %150 = arith.mulf %72, %149 : vector<23x1xf32>
    %151 = arith.subf %150, %73 : vector<23x1xf32>
    %152 = arith.subf %148, %151 : vector<23x1xf32>
    %153 = math.absf %152 : vector<23x1xf32>
    %154 = arith.addf %140, %147 : vector<23x128xf32>
    %155 = arith.addf %141, %153 : vector<23x1xf32>
    %cst_36 = arith.constant dense<0.000000e+00> : vector<128xf32>
    %156 = vector.multi_reduction <add>, %154, %cst_36 [0] : vector<23x128xf32> to vector<128xf32>
    %157 = vector.shape_cast %156 : vector<128xf32> to vector<1x128xf32>
    %cst_37 = arith.constant dense<0.000000e+00> : vector<1xf32>
    %158 = vector.multi_reduction <add>, %155, %cst_37 [0] : vector<23x1xf32> to vector<1xf32>
    %159 = vector.shape_cast %158 : vector<1xf32> to vector<1x1xf32>
    %c0_i32 = arith.constant 0 : i32
    %160 = arith.cmpi eq, %arg0, %c0_i32 : i32
    %cst_38 = arith.constant 0.000000e+00 : f32
    %161 = vector.broadcast %cst_38 : f32 to vector<1x1xf32>
    %162 = arith.select %160, %161, %159 : vector<1x1xf32>
    %163 = tpu.iota {dimensions = array<i32: 1>} : vector<1x128xi32>
    %c0_i32_39 = arith.constant 0 : i32
    %164 = vector.broadcast %c0_i32_39 : i32 to vector<1x128xi32>
    %165 = arith.cmpi eq, %163, %164 : vector<1x128xi32>
    %166 = vector.shape_cast %162 : vector<1x1xf32> to vector<1x1xf32>
    %167 = vector.broadcast %166 : vector<1x1xf32> to vector<1x128xf32>
    %168 = arith.select %165, %167, %157 : vector<1x128xi1>, vector<1x128xf32>
    %c0_40 = arith.constant 0 : index
    %c0_41 = arith.constant 0 : index
    %169 = vector.load %arg3[%c0_40, %c0_41] : memref<1x128xf32, #tpu.memory_space<vmem>>, vector<1x128xf32>
    tpu.vector_store %arg3[%c0_40, %c0_41], %168 {strides = array<i32>} : memref<1x128xf32, #tpu.memory_space<vmem>>, vector<1x128xf32>,
    return
  }
  func.func @transform_0(%arg0: i32) -> (i32, i32, i32) {
    %c0_i32 = arith.constant 0 : i32
    %c0_i32_0 = arith.constant 0 : i32
    %c0_i32_1 = arith.constant 0 : i32
    return %c0_i32, %c0_i32_0, %arg0 : i32, i32, i32
  }
  func.func @transform_1(%arg0: i32) -> (i32, i32, i32) {
    %c1_i32 = arith.constant 1 : i32
    %0 = arith.muli %arg0, %c1_i32 : i32
    %c1_i32_0 = arith.constant 1 : i32
    %1 = arith.subi %0, %c1_i32_0 : i32
    %c0_i32 = arith.constant 0 : i32
    %2 = arith.maxsi %1, %c0_i32 : i32
    %c0_i32_1 = arith.constant 0 : i32
    %c0_i32_2 = arith.constant 0 : i32
    %c0_i32_3 = arith.constant 0 : i32
    return %c0_i32_1, %c0_i32_2, %2 : i32, i32, i32
  }
  func.func @transform_2(%arg0: i32) -> (i32, i32) {
    %c0_i32 = arith.constant 0 : i32
    %c0_i32_0 = arith.constant 0 : i32
    return %c0_i32, %arg0 : i32, i32
  }
}

</mosaic_0001>

<llo_original>
// kernel: tpu_custom_call.1
$region0: #{tpu_custom_call.1}
  #allocation0 [shape = 'u32[]', space=smem, size = 0x4, offset = 0x4, fixed_abs, tag = 'smem constant byte address 0x4 - core index']
  #allocation1 [shape = 'u32[144,128]{1,0:T(1,128)}', space=vmem, size = 0x12000, scoped, tag = 'internal scratch']
  %s0 = inlined_call_operand.vmem [shape: f32[3,23,8], index: 0, kind: input, shape index: {}]
  %s1 = inlined_call_operand.vmem [shape: f32[3,23,8], index: 1, kind: input, shape index: {}]
  %s2 = inlined_call_operand.hbm [shape: f32[1,8], index: 2, kind: output, shape index: {}]
  %s3 = sld [smem:[#allocation0]]
  $region18: #{tpu_custom_call.1} parent=0
    _
  %s5 = ssub.s32 1, %s3
  %s6 = scalar_select 0, %s5, %s3
  $region1: #{tpu_custom_call.1} parent=0
    #allocation2 [shape = 'u8[512]{0}', space=vmem, size = 0x400, scoped, tag = 'output window, operand 0, single buffered']
    #allocation3 [shape = 's32[1]{0}', space=sflag, size = 0x4, scoped, tag = 'scoped memory for tpu_custom_call.1']
    %7 = vsyncpa [#allocation3], 0
    // Predicated region
    $region2: #{tpu_custom_call.1} parent=1 // pred_check
      _
    $region3: #{tpu_custom_call.1} parent=1 // pred_check_branch
      %9 = sbr.rel (0) target = $region5
    $region4: #{tpu_custom_call.1} parent=1 // pred_region
      _
    $region5: #{tpu_custom_call.1} parent=1 // pred_fallthru
      _
    // Predicated region
    $region6: #{tpu_custom_call.1} parent=1 // pred_check
      _
    $region7: #{tpu_custom_call.1} parent=1 // pred_check_branch
      %11 = sbr.rel (0) target = $region9
    $region8: #{tpu_custom_call.1} parent=1 // pred_region
      %s12 = ssub.s32 0, 1
      %p13 = scmp.gt.s32.totalorder %s12, 0
      %s14 = scalar_select %p13, %s12, 0
      %p15 = scmp.lt.s32.totalorder %s14, 0
      %s16 = scalar_select %p15, %s14, 0
      %s17 = smul.addr %s16, 8
      %s18 = scalar_lea.vmem %s1, %s17
      %s19 = ssub.s32 0, 1
      %p20 = scmp.gt.s32.totalorder %s19, 0
      %s21 = scalar_select %p20, %s19, 0
    $region9: #{tpu_custom_call.1} parent=1 // pred_fallthru
      _
    %s22 = ssub.s32 0, 1
    %p23 = scmp.gt.s32.totalorder %s22, 0
    %s24 = scalar_select %p23, %s22, 0
    %p25 = scmp.lt.s32.totalorder %s24, 0
    %s26 = scalar_select %p25, %s24, 0
    %s27 = smul.addr %s26, 8
    %s28 = scalar_lea.vmem %s1, %s27
    %s29 = ssub.s32 0, 1
    %p30 = scmp.gt.s32.totalorder %s29, 0
    %s31 = scalar_select %p30, %s29, 0
    %p32 = scmp.lt.s32.totalorder %s31, 0
    %s33 = scalar_select %p32, %s31, 0
    %s34 = smul.addr %s33, 8
    %s35 = scalar_lea.vmem %s1, %s34
    %s36 = ssub.s32 0, 1
    %p37 = scmp.gt.s32.totalorder %s36, 0
    %s38 = scalar_select %p37, %s36, 0
    %v39 = vld [vmem:[%s0] sm:$0xff]
    %v40 = vld [vmem:[%s0 + $0x8] sm:$0xff]
    %v41 = vld [vmem:[%s0 + $0x10] sm:$0x7f]
    %s42 = scalar_lea.vmem %s0, 24
    %v43 = vld [vmem:[%s42] sm:$0xff]
    %v44 = vld [vmem:[%s42 + $0x8] sm:$0xff]
    %v45 = vld [vmem:[%s42 + $0x10] sm:$0x7f]
    %s46 = scalar_lea.vmem %s0, 48
    %v47 = vld [vmem:[%s46] sm:$0xff]
    %v48 = vld [vmem:[%s46 + $0x8] sm:$0xff]
    %v49 = vld [vmem:[%s46 + $0x10] sm:$0x7f]
    %v50 = vld [vmem:[%s35] sm:$0xff]
    %v51 = vld [vmem:[%s35 + $0x8] sm:$0xff]
    %v52 = vld [vmem:[%s35 + $0x10] sm:$0x7f]
    %s53 = scalar_lea.vmem %s35, 24
    %v54 = vld [vmem:[%s53] sm:$0xff]
    %v55 = vld [vmem:[%s53 + $0x8] sm:$0xff]
    %v56 = vld [vmem:[%s53 + $0x10] sm:$0x7f]
    %s57 = scalar_lea.vmem %s35, 48
    %v58 = vld [vmem:[%s57] sm:$0xff]
    %v59 = vld [vmem:[%s57 + $0x8] sm:$0xff]
    %v60 = vld [vmem:[%s57 + $0x10] sm:$0x7f]
    %v61 = vmul.f32 %v39, %v39
    %v62 = vmul.f32 %v40, %v40
    %v63 = vmul.f32 %v41, %v41
    %v64 = vmul.f32 %v43, %v43
    %v65 = vmul.f32 %v44, %v44
    %v66 = vmul.f32 %v45, %v45
    %v67 = vmul.f32 %v47, %v47
    %v68 = vmul.f32 %v48, %v48
    %v69 = vmul.f32 %v49, %v49
    %v70 = vadd.f32 %v61, %v64
    %v71 = vadd.f32 %v62, %v65
    %v72 = vadd.f32 %v63, %v66
    %v73 = vadd.f32 %v70, %v67
    %v74 = vadd.f32 %v71, %v68
    %v75 = vadd.f32 %v72, %v69
    %vm76 = vcmp.lt.f32.partialorder %v73, 1e-08
    %vm77 = vcmp.lt.f32.partialorder %v74, 1e-08
    %vm78 = vcmp.lt.f32.partialorder %v75, 1e-08
    %v79 = vsel %vm76, 1.0, %v73
    %v80 = vsel %vm77, 1.0, %v74
    %v81 = vsel %vm78, 1.0, %v75
    %v82 = vrsqrt.pop %v79
    %v83 = vrsqrt.pop %v80
    %v84 = vrsqrt.pop %v81
    %v85 = vmul.f32 %v73, %v82
    %v86 = vmul.f32 %v74, %v83
    %v87 = vmul.f32 %v75, %v84
    %v88 = vmul.f32 %v82, %v82
    %v89 = vmul.f32 %v83, %v83
    %v90 = vmul.f32 %v84, %v84
    %v91 = vmul.f32 %v73, 0.16666667
    %v92 = vmul.f32 %v74, 0.16666667
    %v93 = vmul.f32 %v75, 0.16666667
    %v94 = vsub.f32 1.0, %v91
    %v95 = vsub.f32 1.0, %v92
    %v96 = vsub.f32 1.0, %v93
    %v97 = vand.u32 2147483647, %v85
    %vm98 = vcmp.le.f32.partialorder %v97, 0.7853982
    %vm99 = vcmp.lt.s32.totalorder %v85, 0
    %v100 = vand.u32 %v85, 2139095040
    %v101 = vshrl.u32 %v100, 23
    %v102 = vsub.s32 %v101, 127
    %v103 = vand.u32 2147483647, %v85
    %v104 = vand.u32 %v103, 8388607
    %v105 = vor.u32 %v104, 8388608
    %v106 = vsub.s32 0, %v105
    %v107 = vadd.s32 %v102, 1
    %vm108 = vcmp.gt.s32.totalorder %v107, 0
    %v109 = vsel %vm108, %v107, 0
    %v110 = vshrl.u32 %v109, 5
    %v111 = vand.u32 %v109, 31
    %v112 = vsub.s32 32, %v111
    %v113 = vshrl.u32 683565275, %v112
    %v114 = vshll.u32 683565275, %v111
    %v115 = vshrl.u32 2475754826, %v112
    %v116 = vor.u32 %v114, %v115
    %v117 = vshll.u32 2475754826, %v111
    %v118 = vshrl.u32 2131351028, %v112
    %v119 = vor.u32 %v117, %v118
    %v120 = vshll.u32 2131351028, %v111
    %v121 = vshrl.u32 2102212464, %v112
    %v122 = vor.u32 %v120, %v121
    %v123 = vshll.u32 2102212464, %v111
    %v124 = vshrl.u32 920167782, %v112
    %v125 = vor.u32 %v123, %v124
    %v126 = vshll.u32 920167782, %v111
    %v127 = vshrl.u32 1326507024, %v112
    %v128 = vor.u32 %v126, %v127
    %vm129 = vcmp.lt.s32.totalorder %v110, 1
    %vm130 = vcmp.lt.s32.totalorder %v110, 2
    %vm131 = vcmp.lt.s32.totalorder %v110, 3
    %vm132 = vcmp.lt.s32.totalorder %v110, 4
    %v133 = vsel %vm129, %v113, %v116
    %v134 = vsel %vm132, %v122, 2102212464
    %v135 = vsel %vm131, %v119, %v134
    %v136 = vsel %vm130, %v133, %v135
    %v137 = vsel %vm129, %v116, %v119
    %v138 = vsel %vm132, %v125, 920167782
    %v139 = vsel %vm131, %v122, %v138
    %v140 = vsel %vm130, %v137, %v139
    %v141 = vsel %vm129, %v119, %v122
    %v142 = vsel %vm132, %v128, 1326507024
    %v143 = vsel %vm131, %v125, %v142
    %v144 = vsel %vm130, %v141, %v143
    %v145 = vshll.u32 %v105, 8
    %v146 = vmul.u32.u64.compose %v145, %v144
    %v147 = vextract.low.u32 %v146
    %v148 = vextract.high.u32 %v146
    %v149 = vmul.u32.u64.compose %v145, %v140
    %v150 = vextract.low.u32 %v149
    %v151 = vextract.high.u32 %v149
    %v152 = vmul.u32 %v145, %v136
    %v153 = vadd.s32 %v148, %v150
    %vm154 = vc.u32 %v148, %v150
    %v155 = vadd.s32 %v151, 1
    %v156 = vsel %vm154, %v155, %v151
    %v157 = vadd.s32 %v152, %v156
    %v158 = vadd.s32 %v157, 536870912
    %v159 = vshrl.u32 %v158, 30
    %v160 = vshll.u32 %v159, 30
    %v161 = vsub.s32 %v157, %v160
    %vm162 = vcmp.lt.s32.totalorder %v161, 0
    %v163 = vsub.s32 0, %v161
    %v164 = vsel %vm162, %v163, %v161
    %v165 = vclz %v164
    %v166 = vsub.s32 %v165, 2
    %vm167 = vcmp.gt.s32.totalorder 0, %v166
    %v168 = vsel %vm167, 0, %v166
    %v169 = vsub.s32 32, %v168
    %v170 = vshll.u32 %v161, %v168
    %v171 = vshrl.u32 %v153, %v169
    %v172 = vor.u32 %v170, %v171
    %v173 = vsub.s32 4294967266, %v168
    %v174 = vadd.s32 %v173, 127
    %v175 = vshll.u32 %v174, 23
    %v176 = vor.u32 4788187, %v175
    %v177 = vand.u32 2147483647, %v176
    %v179 = vcvt.s32.f32 %v172
    %v180 = vmul.f32 %v179, %v177
    %v181 = vxor.u32 %v180, 2147483648
    %v182 = vsel %vm99, %v181, %v180
    %v183 = vsub.s32 4, %v159
    %v184 = vsel %vm99, %v183, %v159
    %v185 = vsel %vm98, %v85, %v182
    %v186 = vsel %vm98, 0, %v184
    %v187 = vcosq.f32.pop %v185
    %v188 = vsinq.f32.pop %v185
    %vm189 = vweird.f32 %v85
    %v190 = vadd.s32 %v186, 3
    %v191 = vand.u32 %v190, 3
    %vm192 = vcmp.lt.s32.totalorder %v191, 2
    %vm193 = vcmp.eq.s32.totalorder %v191, 0
    %v194 = vxor.u32 %v188, 2147483648
    %v195 = vsel %vm193, %v187, %v194
    %vm196 = vcmp.eq.s32.totalorder %v191, 2
    %v197 = vxor.u32 %v187, 2147483648
    %v198 = vsel %vm196, %v197, %v188
    %v199 = vsel %vm192, %v195, %v198
    %v200 = vsel %vm189, nan, %v199
    %v201 = vand.u32 2147483647, %v86
    %vm202 = vcmp.le.f32.partialorder %v201, 0.7853982
    %vm203 = vcmp.lt.s32.totalorder %v86, 0
    %v204 = vand.u32 %v86, 2139095040
    %v205 = vshrl.u32 %v204, 23
    %v206 = vsub.s32 %v205, 127
    %v207 = vand.u32 2147483647, %v86
    %v208 = vand.u32 %v207, 8388607
    %v209 = vor.u32 %v208, 8388608
    %v210 = vsub.s32 0, %v209
    %v211 = vadd.s32 %v206, 1
    %vm212 = vcmp.gt.s32.totalorder %v211, 0
    %v213 = vsel %vm212, %v211, 0
    %v214 = vshrl.u32 %v213, 5
    %v215 = vand.u32 %v213, 31
    %v216 = vsub.s32 32, %v215
    %v217 = vshrl.u32 683565275, %v216
    %v218 = vshll.u32 683565275, %v215
    %v219 = vshrl.u32 2475754826, %v216
    %v220 = vor.u32 %v218, %v219
    %v221 = vshll.u32 2475754826, %v215
    %v222 = vshrl.u32 2131351028, %v216
    %v223 = vor.u32 %v221, %v222
    %v224 = vshll.u32 2131351028, %v215
    %v225 = vshrl.u32 2102212464, %v216
    %v226 = vor.u32 %v224, %v225
    %v227 = vshll.u32 2102212464, %v215
    %v228 = vshrl.u32 920167782, %v216
    %v229 = vor.u32 %v227, %v228
    %v230 = vshll.u32 920167782, %v215
    %v231 = vshrl.u32 1326507024, %v216
    %v232 = vor.u32 %v230, %v231
    %vm233 = vcmp.lt.s32.totalorder %v214, 1
    %vm234 = vcmp.lt.s32.totalorder %v214, 2
    %vm235 = vcmp.lt.s32.totalorder %v214, 3
    %vm236 = vcmp.lt.s32.totalorder %v214, 4
    %v237 = vsel %vm233, %v217, %v220
    %v238 = vsel %vm236, %v226, 2102212464
    %v239 = vsel %vm235, %v223, %v238
    %v240 = vsel %vm234, %v237, %v239
    %v241 = vsel %vm233, %v220, %v223
    %v242 = vsel %vm236, %v229, 920167782
    %v243 = vsel %vm235, %v226, %v242
    %v244 = vsel %vm234, %v241, %v243
    %v245 = vsel %vm233, %v223, %v226
    %v246 = vsel %vm236, %v232, 1326507024
    %v247 = vsel %vm235, %v229, %v246
    %v248 = vsel %vm234, %v245, %v247
    %v249 = vshll.u32 %v209, 8
    %v250 = vmul.u32.u64.compose %v249, %v248
    %v251 = vextract.low.u32 %v250
    %v252 = vextract.high.u32 %v250
    %v253 = vmul.u32.u64.compose %v249, %v244
    %v254 = vextract.low.u32 %v253
    %v255 = vextract.high.u32 %v253
    %v256 = vmul.u32 %v249, %v240
    %v257 = vadd.s32 %v252, %v254
    %vm258 = vc.u32 %v252, %v254
    %v259 = vadd.s32 %v255, 1
    %v260 = vsel %vm258, %v259, %v255
    %v261 = vadd.s32 %v256, %v260
    %v262 = vadd.s32 %v261, 536870912
    %v263 = vshrl.u32 %v262, 30
    %v264 = vshll.u32 %v263, 30
    %v265 = vsub.s32 %v261, %v264
    %vm266 = vcmp.lt.s32.totalorder %v265, 0
    %v267 = vsub.s32 0, %v265
    %v268 = vsel %vm266, %v267, %v265
    %v269 = vclz %v268
    %v270 = vsub.s32 %v269, 2
    %vm271 = vcmp.gt.s32.totalorder 0, %v270
    %v272 = vsel %vm271, 0, %v270
    %v273 = vsub.s32 32, %v272
    %v274 = vshll.u32 %v265, %v272
    %v275 = vshrl.u32 %v257, %v273
    %v276 = vor.u32 %v274, %v275
    %v277 = vsub.s32 4294967266, %v272
    %v278 = vadd.s32 %v277, 127
    %v279 = vshll.u32 %v278, 23
    %v280 = vor.u32 4788187, %v279
    %v281 = vand.u32 2147483647, %v280
    %v283 = vcvt.s32.f32 %v276
    %v284 = vmul.f32 %v283, %v281
    %v285 = vxor.u32 %v284, 2147483648
    %v286 = vsel %vm203, %v285, %v284
    %v287 = vsub.s32 4, %v263
    %v288 = vsel %vm203, %v287, %v263
    %v289 = vsel %vm202, %v86, %v286
    %v290 = vsel %vm202, 0, %v288
    %v291 = vcosq.f32.pop %v289
    %v292 = vsinq.f32.pop %v289
    %vm293 = vweird.f32 %v86
    %v294 = vadd.s32 %v290, 3
    %v295 = vand.u32 %v294, 3
    %vm296 = vcmp.lt.s32.totalorder %v295, 2
    %vm297 = vcmp.eq.s32.totalorder %v295, 0
    %v298 = vxor.u32 %v292, 2147483648
    %v299 = vsel %vm297, %v291, %v298
    %vm300 = vcmp.eq.s32.totalorder %v295, 2
    %v301 = vxor.u32 %v291, 2147483648
    %v302 = vsel %vm300, %v301, %v292
    %v303 = vsel %vm296, %v299, %v302
    %v304 = vsel %vm293, nan, %v303
    %v305 = vand.u32 2147483647, %v87
    %vm306 = vcmp.le.f32.partialorder %v305, 0.7853982
    %vm307 = vcmp.lt.s32.totalorder %v87, 0
    %v308 = vand.u32 %v87, 2139095040
    %v309 = vshrl.u32 %v308, 23
    %v310 = vsub.s32 %v309, 127
    %v311 = vand.u32 2147483647, %v87
    %v312 = vand.u32 %v311, 8388607
    %v313 = vor.u32 %v312, 8388608
    %v314 = vsub.s32 0, %v313
    %v315 = vadd.s32 %v310, 1
    %vm316 = vcmp.gt.s32.totalorder %v315, 0
    %v317 = vsel %vm316, %v315, 0
    %v318 = vshrl.u32 %v317, 5
    %v319 = vand.u32 %v317, 31
    %v320 = vsub.s32 32, %v319
    %v321 = vshrl.u32 683565275, %v320
    %v322 = vshll.u32 683565275, %v319
    %v323 = vshrl.u32 2475754826, %v320
    %v324 = vor.u32 %v322, %v323
    %v325 = vshll.u32 2475754826, %v319
    %v326 = vshrl.u32 2131351028, %v320
    %v327 = vor.u32 %v325, %v326
    %v328 = vshll.u32 2131351028, %v319
    %v329 = vshrl.u32 2102212464, %v320
    %v330 = vor.u32 %v328, %v329
    %v331 = vshll.u32 2102212464, %v319
    %v332 = vshrl.u32 920167782, %v320
    %v333 = vor.u32 %v331, %v332
    %v334 = vshll.u32 920167782, %v319
    %v335 = vshrl.u32 1326507024, %v320
    %v336 = vor.u32 %v334, %v335
    %vm337 = vcmp.lt.s32.totalorder %v318, 1
    %vm338 = vcmp.lt.s32.totalorder %v318, 2
    %vm339 = vcmp.lt.s32.totalorder %v318, 3
    %vm340 = vcmp.lt.s32.totalorder %v318, 4
    %v341 = vsel %vm337, %v321, %v324
    %v342 = vsel %vm340, %v330, 2102212464
    %v343 = vsel %vm339, %v327, %v342
    %v344 = vsel %vm338, %v341, %v343
    %v345 = vsel %vm337, %v324, %v327
    %v346 = vsel %vm340, %v333, 920167782
    %v347 = vsel %vm339, %v330, %v346
    %v348 = vsel %vm338, %v345, %v347
    %v349 = vsel %vm337, %v327, %v330
    %v350 = vsel %vm340, %v336, 1326507024
    %v351 = vsel %vm339, %v333, %v350
    %v352 = vsel %vm338, %v349, %v351
    %v353 = vshll.u32 %v313, 8
    %v354 = vmul.u32.u64.compose %v353, %v352
    %v355 = vextract.low.u32 %v354
    %v356 = vextract.high.u32 %v354
    %v357 = vmul.u32.u64.compose %v353, %v348
    %v358 = vextract.low.u32 %v357
    %v359 = vextract.high.u32 %v357
    %v360 = vmul.u32 %v353, %v344
    %v361 = vadd.s32 %v356, %v358
    %vm362 = vc.u32 %v356, %v358
    %v363 = vadd.s32 %v359, 1
    %v364 = vsel %vm362, %v363, %v359
    %v365 = vadd.s32 %v360, %v364
    %v366 = vadd.s32 %v365, 536870912
    %v367 = vshrl.u32 %v366, 30
    %v368 = vshll.u32 %v367, 30
    %v369 = vsub.s32 %v365, %v368
    %vm370 = vcmp.lt.s32.totalorder %v369, 0
    %v371 = vsub.s32 0, %v369
    %v372 = vsel %vm370, %v371, %v369
    %v373 = vclz %v372
    %v374 = vsub.s32 %v373, 2
    %vm375 = vcmp.gt.s32.totalorder 0, %v374
    %v376 = vsel %vm375, 0, %v374
    %v377 = vsub.s32 32, %v376
    %v378 = vshll.u32 %v369, %v376
    %v379 = vshrl.u32 %v361, %v377
    %v380 = vor.u32 %v378, %v379
    %v381 = vsub.s32 4294967266, %v376
    %v382 = vadd.s32 %v381, 127
    %v383 = vshll.u32 %v382, 23
    %v384 = vor.u32 4788187, %v383
    %v385 = vand.u32 2147483647, %v384
    %v387 = vcvt.s32.f32 %v380
    %v388 = vmul.f32 %v387, %v385
    %v389 = vxor.u32 %v388, 2147483648
    %v390 = vsel %vm307, %v389, %v388
    %v391 = vsub.s32 4, %v367
    %v392 = vsel %vm307, %v391, %v367
    %v393 = vsel %vm306, %v87, %v390
    %v394 = vsel %vm306, 0, %v392
    %v395 = vcosq.f32.pop %v393
    %v396 = vsinq.f32.pop %v393
    %vm397 = vweird.f32 %v87
    %v398 = vadd.s32 %v394, 3
    %v399 = vand.u32 %v398, 3
    %vm400 = vcmp.lt.s32.totalorder %v399, 2
    %vm401 = vcmp.eq.s32.totalorder %v399, 0
    %v402 = vxor.u32 %v396, 2147483648
    %v403 = vsel %vm401, %v395, %v402
    %vm404 = vcmp.eq.s32.totalorder %v399, 2
    %v405 = vxor.u32 %v395, 2147483648
    %v406 = vsel %vm404, %v405, %v396
    %v407 = vsel %vm400, %v403, %v406
    %v408 = vsel %vm397, nan, %v407
    %v409 = vmul.f32 %v200, %v82
    %v410 = vmul.f32 %v304, %v83
    %v411 = vmul.f32 %v408, %v84
    %v412 = vsel %vm76, %v94, %v409
    %v413 = vsel %vm77, %v95, %v410
    %v414 = vsel %vm78, %v96, %v411
    %v415 = vmul.f32 %v73, 0.041666668
    %v416 = vmul.f32 %v74, 0.041666668
    %v417 = vmul.f32 %v75, 0.041666668
    %v418 = vsub.f32 0.5, %v415
    %v419 = vsub.f32 0.5, %v416
    %v420 = vsub.f32 0.5, %v417
    %v421 = vand.u32 2147483647, %v85
    %vm422 = vcmp.le.f32.partialorder %v421, 0.7853982
    %vm423 = vcmp.lt.s32.totalorder %v85, 0
    %v424 = vand.u32 %v85, 2139095040
    %v425 = vshrl.u32 %v424, 23
    %v426 = vsub.s32 %v425, 127
    %v427 = vand.u32 2147483647, %v85
    %v428 = vand.u32 %v427, 8388607
    %v429 = vor.u32 %v428, 8388608
    %v430 = vsub.s32 0, %v429
    %v431 = vadd.s32 %v426, 1
    %vm432 = vcmp.gt.s32.totalorder %v431, 0
    %v433 = vsel %vm432, %v431, 0
    %v434 = vshrl.u32 %v433, 5
    %v435 = vand.u32 %v433, 31
    %v436 = vsub.s32 32, %v435
    %v437 = vshrl.u32 683565275, %v436
    %v438 = vshll.u32 683565275, %v435
    %v439 = vshrl.u32 2475754826, %v436
    %v440 = vor.u32 %v438, %v439
    %v441 = vshll.u32 2475754826, %v435
    %v442 = vshrl.u32 2131351028, %v436
    %v443 = vor.u32 %v441, %v442
    %v444 = vshll.u32 2131351028, %v435
    %v445 = vshrl.u32 2102212464, %v436
    %v446 = vor.u32 %v444, %v445
    %v447 = vshll.u32 2102212464, %v435
    %v448 = vshrl.u32 920167782, %v436
    %v449 = vor.u32 %v447, %v448
    %v450 = vshll.u32 920167782, %v435
    %v451 = vshrl.u32 1326507024, %v436
    %v452 = vor.u32 %v450, %v451
    %vm453 = vcmp.lt.s32.totalorder %v434, 1
    %vm454 = vcmp.lt.s32.totalorder %v434, 2
    %vm455 = vcmp.lt.s32.totalorder %v434, 3
    %vm456 = vcmp.lt.s32.totalorder %v434, 4
    %v457 = vsel %vm453, %v437, %v440
    %v458 = vsel %vm456, %v446, 2102212464
    %v459 = vsel %vm455, %v443, %v458
    %v460 = vsel %vm454, %v457, %v459
    %v461 = vsel %vm453, %v440, %v443
    %v462 = vsel %vm456, %v449, 920167782
    %v463 = vsel %vm455, %v446, %v462
    %v464 = vsel %vm454, %v461, %v463
    %v465 = vsel %vm453, %v443, %v446
    %v466 = vsel %vm456, %v452, 1326507024
    %v467 = vsel %vm455, %v449, %v466
    %v468 = vsel %vm454, %v465, %v467
    %v469 = vshll.u32 %v429, 8
    %v470 = vmul.u32.u64.compose %v469, %v468
    %v471 = vextract.low.u32 %v470
    %v472 = vextract.high.u32 %v470
    %v473 = vmul.u32.u64.compose %v469, %v464
    %v474 = vextract.low.u32 %v473
    %v475 = vextract.high.u32 %v473
    %v476 = vmul.u32 %v469, %v460
    %v477 = vadd.s32 %v472, %v474
    %vm478 = vc.u32 %v472, %v474
    %v479 = vadd.s32 %v475, 1
    %v480 = vsel %vm478, %v479, %v475
    %v481 = vadd.s32 %v476, %v480
    %v482 = vadd.s32 %v481, 536870912
    %v483 = vshrl.u32 %v482, 30
    %v484 = vshll.u32 %v483, 30
    %v485 = vsub.s32 %v481, %v484
    %vm486 = vcmp.lt.s32.totalorder %v485, 0
    %v487 = vsub.s32 0, %v485
    %v488 = vsel %vm486, %v487, %v485
    %v489 = vclz %v488
    %v490 = vsub.s32 %v489, 2
    %vm491 = vcmp.gt.s32.totalorder 0, %v490
    %v492 = vsel %vm491, 0, %v490
    %v493 = vsub.s32 32, %v492
    %v494 = vshll.u32 %v485, %v492
    %v495 = vshrl.u32 %v477, %v493
    %v496 = vor.u32 %v494, %v495
    %v497 = vsub.s32 4294967266, %v492
    %v498 = vadd.s32 %v497, 127
    %v499 = vshll.u32 %v498, 23
    %v500 = vor.u32 4788187, %v499
    %v501 = vand.u32 2147483647, %v500
    %v503 = vcvt.s32.f32 %v496
    %v504 = vmul.f32 %v503, %v501
    %v505 = vxor.u32 %v504, 2147483648
    %v506 = vsel %vm423, %v505, %v504
    %v507 = vsub.s32 4, %v483
    %v508 = vsel %vm423, %v507, %v483
    %v509 = vsel %vm422, %v85, %v506
    %v510 = vsel %vm422, 0, %v508
    %v511 = vcosq.f32.pop %v509
    %v512 = vsinq.f32.pop %v509
    %vm513 = vweird.f32 %v85
    %v514 = vand.u32 %v510, 3
    %vm515 = vcmp.lt.s32.totalorder %v514, 2
    %vm516 = vcmp.eq.s32.totalorder %v514, 0
    %v517 = vxor.u32 %v512, 2147483648
    %v518 = vsel %vm516, %v511, %v517
    %vm519 = vcmp.eq.s32.totalorder %v514, 2
    %v520 = vxor.u32 %v511, 2147483648
    %v521 = vsel %vm519, %v520, %v512
    %v522 = vsel %vm515, %v518, %v521
    %v523 = vsel %vm513, nan, %v522
    %v524 = vand.u32 2147483647, %v86
    %vm525 = vcmp.le.f32.partialorder %v524, 0.7853982
    %vm526 = vcmp.lt.s32.totalorder %v86, 0
    %v527 = vand.u32 %v86, 2139095040
    %v528 = vshrl.u32 %v527, 23
    %v529 = vsub.s32 %v528, 127
    %v530 = vand.u32 2147483647, %v86
    %v531 = vand.u32 %v530, 8388607
    %v532 = vor.u32 %v531, 8388608
    %v533 = vsub.s32 0, %v532
    %v534 = vadd.s32 %v529, 1
    %vm535 = vcmp.gt.s32.totalorder %v534, 0
    %v536 = vsel %vm535, %v534, 0
    %v537 = vshrl.u32 %v536, 5
    %v538 = vand.u32 %v536, 31
    %v539 = vsub.s32 32, %v538
    %v540 = vshrl.u32 683565275, %v539
    %v541 = vshll.u32 683565275, %v538
    %v542 = vshrl.u32 2475754826, %v539
    %v543 = vor.u32 %v541, %v542
    %v544 = vshll.u32 2475754826, %v538
    %v545 = vshrl.u32 2131351028, %v539
    %v546 = vor.u32 %v544, %v545
    %v547 = vshll.u32 2131351028, %v538
    %v548 = vshrl.u32 2102212464, %v539
    %v549 = vor.u32 %v547, %v548
    %v550 = vshll.u32 2102212464, %v538
    %v551 = vshrl.u32 920167782, %v539
    %v552 = vor.u32 %v550, %v551
    %v553 = vshll.u32 920167782, %v538
    %v554 = vshrl.u32 1326507024, %v539
    %v555 = vor.u32 %v553, %v554
    %vm556 = vcmp.lt.s32.totalorder %v537, 1
    %vm557 = vcmp.lt.s32.totalorder %v537, 2
    %vm558 = vcmp.lt.s32.totalorder %v537, 3
    %vm559 = vcmp.lt.s32.totalorder %v537, 4
    %v560 = vsel %vm556, %v540, %v543
    %v561 = vsel %vm559, %v549, 2102212464
    %v562 = vsel %vm558, %v546, %v561
    %v563 = vsel %vm557, %v560, %v562
    %v564 = vsel %vm556, %v543, %v546
    %v565 = vsel %vm559, %v552, 920167782
    %v566 = vsel %vm558, %v549, %v565
    %v567 = vsel %vm557, %v564, %v566
    %v568 = vsel %vm556, %v546, %v549
    %v569 = vsel %vm559, %v555, 1326507024
    %v570 = vsel %vm558, %v552, %v569
    %v571 = vsel %vm557, %v568, %v570
    %v572 = vshll.u32 %v532, 8
    %v573 = vmul.u32.u64.compose %v572, %v571
    %v574 = vextract.low.u32 %v573
    %v575 = vextract.high.u32 %v573
    %v576 = vmul.u32.u64.compose %v572, %v567
    %v577 = vextract.low.u32 %v576
    %v578 = vextract.high.u32 %v576
    %v579 = vmul.u32 %v572, %v563
    %v580 = vadd.s32 %v575, %v577
    %vm581 = vc.u32 %v575, %v577
    %v582 = vadd.s32 %v578, 1
    %v583 = vsel %vm581, %v582, %v578
    %v584 = vadd.s32 %v579, %v583
    %v585 = vadd.s32 %v584, 536870912
    %v586 = vshrl.u32 %v585, 30
    %v587 = vshll.u32 %v586, 30
    %v588 = vsub.s32 %v584, %v587
    %vm589 = vcmp.lt.s32.totalorder %v588, 0
    %v590 = vsub.s32 0, %v588
    %v591 = vsel %vm589, %v590, %v588
    %v592 = vclz %v591
    %v593 = vsub.s32 %v592, 2
    %vm594 = vcmp.gt.s32.totalorder 0, %v593
    %v595 = vsel %vm594, 0, %v593
    %v596 = vsub.s32 32, %v595
    %v597 = vshll.u32 %v588, %v595
    %v598 = vshrl.u32 %v580, %v596
    %v599 = vor.u32 %v597, %v598
    %v600 = vsub.s32 4294967266, %v595
    %v601 = vadd.s32 %v600, 127
    %v602 = vshll.u32 %v601, 23
    %v603 = vor.u32 4788187, %v602
    %v604 = vand.u32 2147483647, %v603
    %v606 = vcvt.s32.f32 %v599
    %v607 = vmul.f32 %v606, %v604
    %v608 = vxor.u32 %v607, 2147483648
    %v609 = vsel %vm526, %v608, %v607
    %v610 = vsub.s32 4, %v586
    %v611 = vsel %vm526, %v610, %v586
    %v612 = vsel %vm525, %v86, %v609
    %v613 = vsel %vm525, 0, %v611
    %v614 = vcosq.f32.pop %v612
    %v615 = vsinq.f32.pop %v612
    %vm616 = vweird.f32 %v86
    %v617 = vand.u32 %v613, 3
    %vm618 = vcmp.lt.s32.totalorder %v617, 2
    %vm619 = vcmp.eq.s32.totalorder %v617, 0
    %v620 = vxor.u32 %v615, 2147483648
    %v621 = vsel %vm619, %v614, %v620
    %vm622 = vcmp.eq.s32.totalorder %v617, 2
    %v623 = vxor.u32 %v614, 2147483648
    %v624 = vsel %vm622, %v623, %v615
    %v625 = vsel %vm618, %v621, %v624
    %v626 = vsel %vm616, nan, %v625
    %v627 = vand.u32 2147483647, %v87
    %vm628 = vcmp.le.f32.partialorder %v627, 0.7853982
    %vm629 = vcmp.lt.s32.totalorder %v87, 0
    %v630 = vand.u32 %v87, 2139095040
    %v631 = vshrl.u32 %v630, 23
    %v632 = vsub.s32 %v631, 127
    %v633 = vand.u32 2147483647, %v87
    %v634 = vand.u32 %v633, 8388607
    %v635 = vor.u32 %v634, 8388608
    %v636 = vsub.s32 0, %v635
    %v637 = vadd.s32 %v632, 1
    %vm638 = vcmp.gt.s32.totalorder %v637, 0
    %v639 = vsel %vm638, %v637, 0
    %v640 = vshrl.u32 %v639, 5
    %v641 = vand.u32 %v639, 31
    %v642 = vsub.s32 32, %v641
    %v643 = vshrl.u32 683565275, %v642
    %v644 = vshll.u32 683565275, %v641
    %v645 = vshrl.u32 2475754826, %v642
    %v646 = vor.u32 %v644, %v645
    %v647 = vshll.u32 2475754826, %v641
    %v648 = vshrl.u32 2131351028, %v642
    %v649 = vor.u32 %v647, %v648
    %v650 = vshll.u32 2131351028, %v641
    %v651 = vshrl.u32 2102212464, %v642
    %v652 = vor.u32 %v650, %v651
    %v653 = vshll.u32 2102212464, %v641
    %v654 = vshrl.u32 920167782, %v642
    %v655 = vor.u32 %v653, %v654
    %v656 = vshll.u32 920167782, %v641
    %v657 = vshrl.u32 1326507024, %v642
    %v658 = vor.u32 %v656, %v657
    %vm659 = vcmp.lt.s32.totalorder %v640, 1
    %vm660 = vcmp.lt.s32.totalorder %v640, 2
    %vm661 = vcmp.lt.s32.totalorder %v640, 3
    %vm662 = vcmp.lt.s32.totalorder %v640, 4
    %v663 = vsel %vm659, %v643, %v646
    %v664 = vsel %vm662, %v652, 2102212464
    %v665 = vsel %vm661, %v649, %v664
    %v666 = vsel %vm660, %v663, %v665
    %v667 = vsel %vm659, %v646, %v649
    %v668 = vsel %vm662, %v655, 920167782
    %v669 = vsel %vm661, %v652, %v668
    %v670 = vsel %vm660, %v667, %v669
    %v671 = vsel %vm659, %v649, %v652
    %v672 = vsel %vm662, %v658, 1326507024
    %v673 = vsel %vm661, %v655, %v672
    %v674 = vsel %vm660, %v671, %v673
    %v675 = vshll.u32 %v635, 8
    %v676 = vmul.u32.u64.compose %v675, %v674
    %v677 = vextract.low.u32 %v676
    %v678 = vextract.high.u32 %v676
    %v679 = vmul.u32.u64.compose %v675, %v670
    %v680 = vextract.low.u32 %v679
    %v681 = vextract.high.u32 %v679
    %v682 = vmul.u32 %v675, %v666
    %v683 = vadd.s32 %v678, %v680
    %vm684 = vc.u32 %v678, %v680
    %v685 = vadd.s32 %v681, 1
    %v686 = vsel %vm684, %v685, %v681
    %v687 = vadd.s32 %v682, %v686
    %v688 = vadd.s32 %v687, 536870912
    %v689 = vshrl.u32 %v688, 30
    %v690 = vshll.u32 %v689, 30
    %v691 = vsub.s32 %v687, %v690
    %vm692 = vcmp.lt.s32.totalorder %v691, 0
    %v693 = vsub.s32 0, %v691
    %v694 = vsel %vm692, %v693, %v691
    %v695 = vclz %v694
    %v696 = vsub.s32 %v695, 2
    %vm697 = vcmp.gt.s32.totalorder 0, %v696
    %v698 = vsel %vm697, 0, %v696
    %v699 = vsub.s32 32, %v698
    %v700 = vshll.u32 %v691, %v698
    %v701 = vshrl.u32 %v683, %v699
    %v702 = vor.u32 %v700, %v701
    %v703 = vsub.s32 4294967266, %v698
    %v704 = vadd.s32 %v703, 127
    %v705 = vshll.u32 %v704, 23
    %v706 = vor.u32 4788187, %v705
    %v707 = vand.u32 2147483647, %v706
    %v709 = vcvt.s32.f32 %v702
    %v710 = vmul.f32 %v709, %v707
    %v711 = vxor.u32 %v710, 2147483648
    %v712 = vsel %vm629, %v711, %v710
    %v713 = vsub.s32 4, %v689
    %v714 = vsel %vm629, %v713, %v689
    %v715 = vsel %vm628, %v87, %v712
    %v716 = vsel %vm628, 0, %v714
    %v717 = vcosq.f32.pop %v715
    %v718 = vsinq.f32.pop %v715
    %vm719 = vweird.f32 %v87
    %v720 = vand.u32 %v716, 3
    %vm721 = vcmp.lt.s32.totalorder %v720, 2
    %vm722 = vcmp.eq.s32.totalorder %v720, 0
    %v723 = vxor.u32 %v718, 2147483648
    %v724 = vsel %vm722, %v717, %v723
    %vm725 = vcmp.eq.s32.totalorder %v720, 2
    %v726 = vxor.u32 %v717, 2147483648
    %v727 = vsel %vm725, %v726, %v718
    %v728 = vsel %vm721, %v724, %v727
    %v729 = vsel %vm719, nan, %v728
    %v730 = vsub.f32 1.0, %v523
    %v731 = vsub.f32 1.0, %v626
    %v732 = vsub.f32 1.0, %v729
    %v733 = vmul.f32 %v730, %v88
    %v734 = vmul.f32 %v731, %v89
    %v735 = vmul.f32 %v732, %v90
    %v736 = vsel %vm76, %v418, %v733
    %v737 = vsel %vm77, %v419, %v734
    %v738 = vsel %vm78, %v420, %v735
    %v739 = vmul.f32 %v412, %v39
    %v740 = vmul.f32 %v413, %v40
    %v741 = vmul.f32 %v414, %v41
    %v742 = vmul.f32 %v412, %v43
    %v743 = vmul.f32 %v413, %v44
    %v744 = vmul.f32 %v414, %v45
    %v745 = vmul.f32 %v412, %v47
    %v746 = vmul.f32 %v413, %v48
    %v747 = vmul.f32 %v414, %v49
    %v748 = vmul.f32 %v39, %v43
    %v749 = vmul.f32 %v40, %v44
    %v750 = vmul.f32 %v41, %v45
    %v751 = vmul.f32 %v736, %v748
    %v752 = vmul.f32 %v737, %v749
    %v753 = vmul.f32 %v738, %v750
    %v754 = vmul.f32 %v50, %v50
    %v755 = vmul.f32 %v51, %v51
    %v756 = vmul.f32 %v52, %v52
    %v757 = vmul.f32 %v54, %v54
    %v758 = vmul.f32 %v55, %v55
    %v759 = vmul.f32 %v56, %v56
    %v760 = vmul.f32 %v58, %v58
    %v761 = vmul.f32 %v59, %v59
    %v762 = vmul.f32 %v60, %v60
    %v763 = vadd.f32 %v754, %v757
    %v764 = vadd.f32 %v755, %v758
    %v765 = vadd.f32 %v756, %v759
    %v766 = vadd.f32 %v763, %v760
    %v767 = vadd.f32 %v764, %v761
    %v768 = vadd.f32 %v765, %v762
    %vm769 = vcmp.lt.f32.partialorder %v766, 1e-08
    %vm770 = vcmp.lt.f32.partialorder %v767, 1e-08
    %vm771 = vcmp.lt.f32.partialorder %v768, 1e-08
    %v772 = vsel %vm769, 1.0, %v766
    %v773 = vsel %vm770, 1.0, %v767
    %v774 = vsel %vm771, 1.0, %v768
    %v775 = vrsqrt.pop %v772
    %v776 = vrsqrt.pop %v773
    %v777 = vrsqrt.pop %v774
    %v778 = vmul.f32 %v766, %v775
    %v779 = vmul.f32 %v767, %v776
    %v780 = vmul.f32 %v768, %v777
    %v781 = vmul.f32 %v775, %v775
    %v782 = vmul.f32 %v776, %v776
    %v783 = vmul.f32 %v777, %v777
    %v784 = vmul.f32 %v766, 0.16666667
    %v785 = vmul.f32 %v767, 0.16666667
    %v786 = vmul.f32 %v768, 0.16666667
    %v787 = vsub.f32 1.0, %v784
    %v788 = vsub.f32 1.0, %v785
    %v789 = vsub.f32 1.0, %v786
    %v790 = vand.u32 2147483647, %v778
    %vm791 = vcmp.le.f32.partialorder %v790, 0.7853982
    %vm792 = vcmp.lt.s32.totalorder %v778, 0
    %v793 = vand.u32 %v778, 2139095040
    %v794 = vshrl.u32 %v793, 23
    %v795 = vsub.s32 %v794, 127
    %v796 = vand.u32 2147483647, %v778
    %v797 = vand.u32 %v796, 8388607
    %v798 = vor.u32 %v797, 8388608
    %v799 = vsub.s32 0, %v798
    %v800 = vadd.s32 %v795, 1
    %vm801 = vcmp.gt.s32.totalorder %v800, 0
    %v802 = vsel %vm801, %v800, 0
    %v803 = vshrl.u32 %v802, 5
    %v804 = vand.u32 %v802, 31
    %v805 = vsub.s32 32, %v804
    %v806 = vshrl.u32 683565275, %v805
    %v807 = vshll.u32 683565275, %v804
    %v808 = vshrl.u32 2475754826, %v805
    %v809 = vor.u32 %v807, %v808
    %v810 = vshll.u32 2475754826, %v804
    %v811 = vshrl.u32 2131351028, %v805
    %v812 = vor.u32 %v810, %v811
    %v813 = vshll.u32 2131351028, %v804
    %v814 = vshrl.u32 2102212464, %v805
    %v815 = vor.u32 %v813, %v814
    %v816 = vshll.u32 2102212464, %v804
    %v817 = vshrl.u32 920167782, %v805
    %v818 = vor.u32 %v816, %v817
    %v819 = vshll.u32 920167782, %v804
    %v820 = vshrl.u32 1326507024, %v805
    %v821 = vor.u32 %v819, %v820
    %vm822 = vcmp.lt.s32.totalorder %v803, 1
    %vm823 = vcmp.lt.s32.totalorder %v803, 2
    %vm824 = vcmp.lt.s32.totalorder %v803, 3
    %vm825 = vcmp.lt.s32.totalorder %v803, 4
    %v826 = vsel %vm822, %v806, %v809
    %v827 = vsel %vm825, %v815, 2102212464
    %v828 = vsel %vm824, %v812, %v827
    %v829 = vsel %vm823, %v826, %v828
    %v830 = vsel %vm822, %v809, %v812
    %v831 = vsel %vm825, %v818, 920167782
    %v832 = vsel %vm824, %v815, %v831
    %v833 = vsel %vm823, %v830, %v832
    %v834 = vsel %vm822, %v812, %v815
    %v835 = vsel %vm825, %v821, 1326507024
    %v836 = vsel %vm824, %v818, %v835
    %v837 = vsel %vm823, %v834, %v836
    %v838 = vshll.u32 %v798, 8
    %v839 = vmul.u32.u64.compose %v838, %v837
    %v840 = vextract.low.u32 %v839
    %v841 = vextract.high.u32 %v839
    %v842 = vmul.u32.u64.compose %v838, %v833
    %v843 = vextract.low.u32 %v842
    %v844 = vextract.high.u32 %v842
    %v845 = vmul.u32 %v838, %v829
    %v846 = vadd.s32 %v841, %v843
    %vm847 = vc.u32 %v841, %v843
    %v848 = vadd.s32 %v844, 1
    %v849 = vsel %vm847, %v848, %v844
    %v850 = vadd.s32 %v845, %v849
    %v851 = vadd.s32 %v850, 536870912
    %v852 = vshrl.u32 %v851, 30
    %v853 = vshll.u32 %v852, 30
    %v854 = vsub.s32 %v850, %v853
    %vm855 = vcmp.lt.s32.totalorder %v854, 0
    %v856 = vsub.s32 0, %v854
    %v857 = vsel %vm855, %v856, %v854
    %v858 = vclz %v857
    %v859 = vsub.s32 %v858, 2
    %vm860 = vcmp.gt.s32.totalorder 0, %v859
    %v861 = vsel %vm860, 0, %v859
    %v862 = vsub.s32 32, %v861
    %v863 = vshll.u32 %v854, %v861
    %v864 = vshrl.u32 %v846, %v862
    %v865 = vor.u32 %v863, %v864
    %v866 = vsub.s32 4294967266, %v861
    %v867 = vadd.s32 %v866, 127
    %v868 = vshll.u32 %v867, 23
    %v869 = vor.u32 4788187, %v868
    %v870 = vand.u32 2147483647, %v869
    %v872 = vcvt.s32.f32 %v865
    %v873 = vmul.f32 %v872, %v870
    %v874 = vxor.u32 %v873, 2147483648
    %v875 = vsel %vm792, %v874, %v873
    %v876 = vsub.s32 4, %v852
    %v877 = vsel %vm792, %v876, %v852
    %v878 = vsel %vm791, %v778, %v875
    %v879 = vsel %vm791, 0, %v877
    %v880 = vcosq.f32.pop %v878
    %v881 = vsinq.f32.pop %v878
    %vm882 = vweird.f32 %v778
    %v883 = vadd.s32 %v879, 3
    %v884 = vand.u32 %v883, 3
    %vm885 = vcmp.lt.s32.totalorder %v884, 2
    %vm886 = vcmp.eq.s32.totalorder %v884, 0
    %v887 = vxor.u32 %v881, 2147483648
    %v888 = vsel %vm886, %v880, %v887
    %vm889 = vcmp.eq.s32.totalorder %v884, 2
    %v890 = vxor.u32 %v880, 2147483648
    %v891 = vsel %vm889, %v890, %v881
    %v892 = vsel %vm885, %v888, %v891
    %v893 = vsel %vm882, nan, %v892
    %v894 = vand.u32 2147483647, %v779
    %vm895 = vcmp.le.f32.partialorder %v894, 0.7853982
    %vm896 = vcmp.lt.s32.totalorder %v779, 0
    %v897 = vand.u32 %v779, 2139095040
    %v898 = vshrl.u32 %v897, 23
    %v899 = vsub.s32 %v898, 127
    %v900 = vand.u32 2147483647, %v779
    %v901 = vand.u32 %v900, 8388607
    %v902 = vor.u32 %v901, 8388608
    %v903 = vsub.s32 0, %v902
    %v904 = vadd.s32 %v899, 1
    %vm905 = vcmp.gt.s32.totalorder %v904, 0
    %v906 = vsel %vm905, %v904, 0
    %v907 = vshrl.u32 %v906, 5
    %v908 = vand.u32 %v906, 31
    %v909 = vsub.s32 32, %v908
    %v910 = vshrl.u32 683565275, %v909
    %v911 = vshll.u32 683565275, %v908
    %v912 = vshrl.u32 2475754826, %v909
    %v913 = vor.u32 %v911, %v912
    %v914 = vshll.u32 2475754826, %v908
    %v915 = vshrl.u32 2131351028, %v909
    %v916 = vor.u32 %v914, %v915
    %v917 = vshll.u32 2131351028, %v908
    %v918 = vshrl.u32 2102212464, %v909
    %v919 = vor.u32 %v917, %v918
    %v920 = vshll.u32 2102212464, %v908
    %v921 = vshrl.u32 920167782, %v909
    %v922 = vor.u32 %v920, %v921
    %v923 = vshll.u32 920167782, %v908
    %v924 = vshrl.u32 1326507024, %v909
    %v925 = vor.u32 %v923, %v924
    %vm926 = vcmp.lt.s32.totalorder %v907, 1
    %vm927 = vcmp.lt.s32.totalorder %v907, 2
    %vm928 = vcmp.lt.s32.totalorder %v907, 3
    %vm929 = vcmp.lt.s32.totalorder %v907, 4
    %v930 = vsel %vm926, %v910, %v913
    %v931 = vsel %vm929, %v919, 2102212464
    %v932 = vsel %vm928, %v916, %v931
    %v933 = vsel %vm927, %v930, %v932
    %v934 = vsel %vm926, %v913, %v916
    %v935 = vsel %vm929, %v922, 920167782
    %v936 = vsel %vm928, %v919, %v935
    %v937 = vsel %vm927, %v934, %v936
    %v938 = vsel %vm926, %v916, %v919
    %v939 = vsel %vm929, %v925, 1326507024
    %v940 = vsel %vm928, %v922, %v939
    %v941 = vsel %vm927, %v938, %v940
    %v942 = vshll.u32 %v902, 8
    %v943 = vmul.u32.u64.compose %v942, %v941
    %v944 = vextract.low.u32 %v943
    %v945 = vextract.high.u32 %v943
    %v946 = vmul.u32.u64.compose %v942, %v937
    %v947 = vextract.low.u32 %v946
    %v948 = vextract.high.u32 %v946
    %v949 = vmul.u32 %v942, %v933
    %v950 = vadd.s32 %v945, %v947
    %vm951 = vc.u32 %v945, %v947
    %v952 = vadd.s32 %v948, 1
    %v953 = vsel %vm951, %v952, %v948
    %v954 = vadd.s32 %v949, %v953
    %v955 = vadd.s32 %v954, 536870912
    %v956 = vshrl.u32 %v955, 30
    %v957 = vshll.u32 %v956, 30
    %v958 = vsub.s32 %v954, %v957
    %vm959 = vcmp.lt.s32.totalorder %v958, 0
    %v960 = vsub.s32 0, %v958
    %v961 = vsel %vm959, %v960, %v958
    %v962 = vclz %v961
    %v963 = vsub.s32 %v962, 2
    %vm964 = vcmp.gt.s32.totalorder 0, %v963
    %v965 = vsel %vm964, 0, %v963
    %v966 = vsub.s32 32, %v965
    %v967 = vshll.u32 %v958, %v965
    %v968 = vshrl.u32 %v950, %v966
    %v969 = vor.u32 %v967, %v968
    %v970 = vsub.s32 4294967266, %v965
    %v971 = vadd.s32 %v970, 127
    %v972 = vshll.u32 %v971, 23
    %v973 = vor.u32 4788187, %v972
    %v974 = vand.u32 2147483647, %v973
    %v976 = vcvt.s32.f32 %v969
    %v977 = vmul.f32 %v976, %v974
    %v978 = vxor.u32 %v977, 2147483648
    %v979 = vsel %vm896, %v978, %v977
    %v980 = vsub.s32 4, %v956
    %v981 = vsel %vm896, %v980, %v956
    %v982 = vsel %vm895, %v779, %v979
    %v983 = vsel %vm895, 0, %v981
    %v984 = vcosq.f32.pop %v982
    %v985 = vsinq.f32.pop %v982
    %vm986 = vweird.f32 %v779
    %v987 = vadd.s32 %v983, 3
    %v988 = vand.u32 %v987, 3
    %vm989 = vcmp.lt.s32.totalorder %v988, 2
    %vm990 = vcmp.eq.s32.totalorder %v988, 0
    %v991 = vxor.u32 %v985, 2147483648
    %v992 = vsel %vm990, %v984, %v991
    %vm993 = vcmp.eq.s32.totalorder %v988, 2
    %v994 = vxor.u32 %v984, 2147483648
    %v995 = vsel %vm993, %v994, %v985
    %v996 = vsel %vm989, %v992, %v995
    %v997 = vsel %vm986, nan, %v996
    %v998 = vand.u32 2147483647, %v780
    %vm999 = vcmp.le.f32.partialorder %v998, 0.7853982
    %vm1000 = vcmp.lt.s32.totalorder %v780, 0
    %v1001 = vand.u32 %v780, 2139095040
    %v1002 = vshrl.u32 %v1001, 23
    %v1003 = vsub.s32 %v1002, 127
    %v1004 = vand.u32 2147483647, %v780
    %v1005 = vand.u32 %v1004, 8388607
    %v1006 = vor.u32 %v1005, 8388608
    %v1007 = vsub.s32 0, %v1006
    %v1008 = vadd.s32 %v1003, 1
    %vm1009 = vcmp.gt.s32.totalorder %v1008, 0
    %v1010 = vsel %vm1009, %v1008, 0
    %v1011 = vshrl.u32 %v1010, 5
    %v1012 = vand.u32 %v1010, 31
    %v1013 = vsub.s32 32, %v1012
    %v1014 = vshrl.u32 683565275, %v1013
    %v1015 = vshll.u32 683565275, %v1012
    %v1016 = vshrl.u32 2475754826, %v1013
    %v1017 = vor.u32 %v1015, %v1016
    %v1018 = vshll.u32 2475754826, %v1012
    %v1019 = vshrl.u32 2131351028, %v1013
    %v1020 = vor.u32 %v1018, %v1019
    %v1021 = vshll.u32 2131351028, %v1012
    %v1022 = vshrl.u32 2102212464, %v1013
    %v1023 = vor.u32 %v1021, %v1022
    %v1024 = vshll.u32 2102212464, %v1012
    %v1025 = vshrl.u32 920167782, %v1013
    %v1026 = vor.u32 %v1024, %v1025
    %v1027 = vshll.u32 920167782, %v1012
    %v1028 = vshrl.u32 1326507024, %v1013
    %v1029 = vor.u32 %v1027, %v1028
    %vm1030 = vcmp.lt.s32.totalorder %v1011, 1
    %vm1031 = vcmp.lt.s32.totalorder %v1011, 2
    %vm1032 = vcmp.lt.s32.totalorder %v1011, 3
    %vm1033 = vcmp.lt.s32.totalorder %v1011, 4
    %v1034 = vsel %vm1030, %v1014, %v1017
    %v1035 = vsel %vm1033, %v1023, 2102212464
    %v1036 = vsel %vm1032, %v1020, %v1035
    %v1037 = vsel %vm1031, %v1034, %v1036
    %v1038 = vsel %vm1030, %v1017, %v1020
    %v1039 = vsel %vm1033, %v1026, 920167782
    %v1040 = vsel %vm1032, %v1023, %v1039
    %v1041 = vsel %vm1031, %v1038, %v1040
    %v1042 = vsel %vm1030, %v1020, %v1023
    %v1043 = vsel %vm1033, %v1029, 1326507024
    %v1044 = vsel %vm1032, %v1026, %v1043
    %v1045 = vsel %vm1031, %v1042, %v1044
    %v1046 = vshll.u32 %v1006, 8
    %v1047 = vmul.u32.u64.compose %v1046, %v1045
    %v1048 = vextract.low.u32 %v1047
    %v1049 = vextract.high.u32 %v1047
    %v1050 = vmul.u32.u64.compose %v1046, %v1041
    %v1051 = vextract.low.u32 %v1050
    %v1052 = vextract.high.u32 %v1050
    %v1053 = vmul.u32 %v1046, %v1037
    %v1054 = vadd.s32 %v1049, %v1051
    %vm1055 = vc.u32 %v1049, %v1051
    %v1056 = vadd.s32 %v1052, 1
    %v1057 = vsel %vm1055, %v1056, %v1052
    %v1058 = vadd.s32 %v1053, %v1057
    %v1059 = vadd.s32 %v1058, 536870912
    %v1060 = vshrl.u32 %v1059, 30
    %v1061 = vshll.u32 %v1060, 30
    %v1062 = vsub.s32 %v1058, %v1061
    %vm1063 = vcmp.lt.s32.totalorder %v1062, 0
    %v1064 = vsub.s32 0, %v1062
    %v1065 = vsel %vm1063, %v1064, %v1062
    %v1066 = vclz %v1065
    %v1067 = vsub.s32 %v1066, 2
    %vm1068 = vcmp.gt.s32.totalorder 0, %v1067
    %v1069 = vsel %vm1068, 0, %v1067
    %v1070 = vsub.s32 32, %v1069
    %v1071 = vshll.u32 %v1062, %v1069
    %v1072 = vshrl.u32 %v1054, %v1070
    %v1073 = vor.u32 %v1071, %v1072
    %v1074 = vsub.s32 4294967266, %v1069
    %v1075 = vadd.s32 %v1074, 127
    %v1076 = vshll.u32 %v1075, 23
    %v1077 = vor.u32 4788187, %v1076
    %v1078 = vand.u32 2147483647, %v1077
    %v1080 = vcvt.s32.f32 %v1073
    %v1081 = vmul.f32 %v1080, %v1078
    %v1082 = vxor.u32 %v1081, 2147483648
    %v1083 = vsel %vm1000, %v1082, %v1081
    %v1084 = vsub.s32 4, %v1060
    %v1085 = vsel %vm1000, %v1084, %v1060
    %v1086 = vsel %vm999, %v780, %v1083
    %v1087 = vsel %vm999, 0, %v1085
    %v1088 = vcosq.f32.pop %v1086
    %v1089 = vsinq.f32.pop %v1086
    %vm1090 = vweird.f32 %v780
    %v1091 = vadd.s32 %v1087, 3
    %v1092 = vand.u32 %v1091, 3
    %vm1093 = vcmp.lt.s32.totalorder %v1092, 2
    %vm1094 = vcmp.eq.s32.totalorder %v1092, 0
    %v1095 = vxor.u32 %v1089, 2147483648
    %v1096 = vsel %vm1094, %v1088, %v1095
    %vm1097 = vcmp.eq.s32.totalorder %v1092, 2
    %v1098 = vxor.u32 %v1088, 2147483648
    %v1099 = vsel %vm1097, %v1098, %v1089
    %v1100 = vsel %vm1093, %v1096, %v1099
    %v1101 = vsel %vm1090, nan, %v1100
    %v1102 = vmul.f32 %v893, %v775
    %v1103 = vmul.f32 %v997, %v776
    %v1104 = vmul.f32 %v1101, %v777
    %v1105 = vsel %vm769, %v787, %v1102
    %v1106 = vsel %vm770, %v788, %v1103
    %v1107 = vsel %vm771, %v789, %v1104
    %v1108 = vmul.f32 %v766, 0.041666668
    %v1109 = vmul.f32 %v767, 0.041666668
    %v1110 = vmul.f32 %v768, 0.041666668
    %v1111 = vsub.f32 0.5, %v1108
    %v1112 = vsub.f32 0.5, %v1109
    %v1113 = vsub.f32 0.5, %v1110
    %v1114 = vand.u32 2147483647, %v778
    %vm1115 = vcmp.le.f32.partialorder %v1114, 0.7853982
    %vm1116 = vcmp.lt.s32.totalorder %v778, 0
    %v1117 = vand.u32 %v778, 2139095040
    %v1118 = vshrl.u32 %v1117, 23
    %v1119 = vsub.s32 %v1118, 127
    %v1120 = vand.u32 2147483647, %v778
    %v1121 = vand.u32 %v1120, 8388607
    %v1122 = vor.u32 %v1121, 8388608
    %v1123 = vsub.s32 0, %v1122
    %v1124 = vadd.s32 %v1119, 1
    %vm1125 = vcmp.gt.s32.totalorder %v1124, 0
    %v1126 = vsel %vm1125, %v1124, 0
    %v1127 = vshrl.u32 %v1126, 5
    %v1128 = vand.u32 %v1126, 31
    %v1129 = vsub.s32 32, %v1128
    %v1130 = vshrl.u32 683565275, %v1129
    %v1131 = vshll.u32 683565275, %v1128
    %v1132 = vshrl.u32 2475754826, %v1129
    %v1133 = vor.u32 %v1131, %v1132
    %v1134 = vshll.u32 2475754826, %v1128
    %v1135 = vshrl.u32 2131351028, %v1129
    %v1136 = vor.u32 %v1134, %v1135
    %v1137 = vshll.u32 2131351028, %v1128
    %v1138 = vshrl.u32 2102212464, %v1129
    %v1139 = vor.u32 %v1137, %v1138
    %v1140 = vshll.u32 2102212464, %v1128
    %v1141 = vshrl.u32 920167782, %v1129
    %v1142 = vor.u32 %v1140, %v1141
    %v1143 = vshll.u32 920167782, %v1128
    %v1144 = vshrl.u32 1326507024, %v1129
    %v1145 = vor.u32 %v1143, %v1144
    %vm1146 = vcmp.lt.s32.totalorder %v1127, 1
    %vm1147 = vcmp.lt.s32.totalorder %v1127, 2
    %vm1148 = vcmp.lt.s32.totalorder %v1127, 3
    %vm1149 = vcmp.lt.s32.totalorder %v1127, 4
    %v1150 = vsel %vm1146, %v1130, %v1133
    %v1151 = vsel %vm1149, %v1139, 2102212464
    %v1152 = vsel %vm1148, %v1136, %v1151
    %v1153 = vsel %vm1147, %v1150, %v1152
    %v1154 = vsel %vm1146, %v1133, %v1136
    %v1155 = vsel %vm1149, %v1142, 920167782
    %v1156 = vsel %vm1148, %v1139, %v1155
    %v1157 = vsel %vm1147, %v1154, %v1156
    %v1158 = vsel %vm1146, %v1136, %v1139
    %v1159 = vsel %vm1149, %v1145, 1326507024
    %v1160 = vsel %vm1148, %v1142, %v1159
    %v1161 = vsel %vm1147, %v1158, %v1160
    %v1162 = vshll.u32 %v1122, 8
    %v1163 = vmul.u32.u64.compose %v1162, %v1161
    %v1164 = vextract.low.u32 %v1163
    %v1165 = vextract.high.u32 %v1163
    %v1166 = vmul.u32.u64.compose %v1162, %v1157
    %v1167 = vextract.low.u32 %v1166
    %v1168 = vextract.high.u32 %v1166
    %v1169 = vmul.u32 %v1162, %v1153
    %v1170 = vadd.s32 %v1165, %v1167
    %vm1171 = vc.u32 %v1165, %v1167
    %v1172 = vadd.s32 %v1168, 1
    %v1173 = vsel %vm1171, %v1172, %v1168
    %v1174 = vadd.s32 %v1169, %v1173
    %v1175 = vadd.s32 %v1174, 536870912
    %v1176 = vshrl.u32 %v1175, 30
    %v1177 = vshll.u32 %v1176, 30
    %v1178 = vsub.s32 %v1174, %v1177
    %vm1179 = vcmp.lt.s32.totalorder %v1178, 0
    %v1180 = vsub.s32 0, %v1178
    %v1181 = vsel %vm1179, %v1180, %v1178
    %v1182 = vclz %v1181
    %v1183 = vsub.s32 %v1182, 2
    %vm1184 = vcmp.gt.s32.totalorder 0, %v1183
    %v1185 = vsel %vm1184, 0, %v1183
    %v1186 = vsub.s32 32, %v1185
    %v1187 = vshll.u32 %v1178, %v1185
    %v1188 = vshrl.u32 %v1170, %v1186
    %v1189 = vor.u32 %v1187, %v1188
    %v1190 = vsub.s32 4294967266, %v1185
    %v1191 = vadd.s32 %v1190, 127
    %v1192 = vshll.u32 %v1191, 23
    %v1193 = vor.u32 4788187, %v1192
    %v1194 = vand.u32 2147483647, %v1193
    %v1196 = vcvt.s32.f32 %v1189
    %v1197 = vmul.f32 %v1196, %v1194
    %v1198 = vxor.u32 %v1197, 2147483648
    %v1199 = vsel %vm1116, %v1198, %v1197
    %v1200 = vsub.s32 4, %v1176
    %v1201 = vsel %vm1116, %v1200, %v1176
    %v1202 = vsel %vm1115, %v778, %v1199
    %v1203 = vsel %vm1115, 0, %v1201
    %v1204 = vcosq.f32.pop %v1202
    %v1205 = vsinq.f32.pop %v1202
    %vm1206 = vweird.f32 %v778
    %v1207 = vand.u32 %v1203, 3
    %vm1208 = vcmp.lt.s32.totalorder %v1207, 2
    %vm1209 = vcmp.eq.s32.totalorder %v1207, 0
    %v1210 = vxor.u32 %v1205, 2147483648
    %v1211 = vsel %vm1209, %v1204, %v1210
    %vm1212 = vcmp.eq.s32.totalorder %v1207, 2
    %v1213 = vxor.u32 %v1204, 2147483648
    %v1214 = vsel %vm1212, %v1213, %v1205
    %v1215 = vsel %vm1208, %v1211, %v1214
    %v1216 = vsel %vm1206, nan, %v1215
    %v1217 = vand.u32 2147483647, %v779
    %vm1218 = vcmp.le.f32.partialorder %v1217, 0.7853982
    %vm1219 = vcmp.lt.s32.totalorder %v779, 0
    %v1220 = vand.u32 %v779, 2139095040
    %v1221 = vshrl.u32 %v1220, 23
    %v1222 = vsub.s32 %v1221, 127
    %v1223 = vand.u32 2147483647, %v779
    %v1224 = vand.u32 %v1223, 8388607
    %v1225 = vor.u32 %v1224, 8388608
    %v1226 = vsub.s32 0, %v1225
    %v1227 = vadd.s32 %v1222, 1
    %vm1228 = vcmp.gt.s32.totalorder %v1227, 0
    %v1229 = vsel %vm1228, %v1227, 0
    %v1230 = vshrl.u32 %v1229, 5
    %v1231 = vand.u32 %v1229, 31
    %v1232 = vsub.s32 32, %v1231
    %v1233 = vshrl.u32 683565275, %v1232
    %v1234 = vshll.u32 683565275, %v1231
    %v1235 = vshrl.u32 2475754826, %v1232
    %v1236 = vor.u32 %v1234, %v1235
    %v1237 = vshll.u32 2475754826, %v1231
    %v1238 = vshrl.u32 2131351028, %v1232
    %v1239 = vor.u32 %v1237, %v1238
    %v1240 = vshll.u32 2131351028, %v1231
    %v1241 = vshrl.u32 2102212464, %v1232
    %v1242 = vor.u32 %v1240, %v1241
    %v1243 = vshll.u32 2102212464, %v1231
    %v1244 = vshrl.u32 920167782, %v1232
    %v1245 = vor.u32 %v1243, %v1244
    %v1246 = vshll.u32 920167782, %v1231
    %v1247 = vshrl.u32 1326507024, %v1232
    %v1248 = vor.u32 %v1246, %v1247
    %vm1249 = vcmp.lt.s32.totalorder %v1230, 1
    %vm1250 = vcmp.lt.s32.totalorder %v1230, 2
    %vm1251 = vcmp.lt.s32.totalorder %v1230, 3
    %vm1252 = vcmp.lt.s32.totalorder %v1230, 4
    %v1253 = vsel %vm1249, %v1233, %v1236
    %v1254 = vsel %vm1252, %v1242, 2102212464
    %v1255 = vsel %vm1251, %v1239, %v1254
    %v1256 = vsel %vm1250, %v1253, %v1255
    %v1257 = vsel %vm1249, %v1236, %v1239
    %v1258 = vsel %vm1252, %v1245, 920167782
    %v1259 = vsel %vm1251, %v1242, %v1258
    %v1260 = vsel %vm1250, %v1257, %v1259
    %v1261 = vsel %vm1249, %v1239, %v1242
    %v1262 = vsel %vm1252, %v1248, 1326507024
    %v1263 = vsel %vm1251, %v1245, %v1262
    %v1264 = vsel %vm1250, %v1261, %v1263
    %v1265 = vshll.u32 %v1225, 8
    %v1266 = vmul.u32.u64.compose %v1265, %v1264
    %v1267 = vextract.low.u32 %v1266
    %v1268 = vextract.high.u32 %v1266
    %v1269 = vmul.u32.u64.compose %v1265, %v1260
    %v1270 = vextract.low.u32 %v1269
    %v1271 = vextract.high.u32 %v1269
    %v1272 = vmul.u32 %v1265, %v1256
    %v1273 = vadd.s32 %v1268, %v1270
    %vm1274 = vc.u32 %v1268, %v1270
    %v1275 = vadd.s32 %v1271, 1
    %v1276 = vsel %vm1274, %v1275, %v1271
    %v1277 = vadd.s32 %v1272, %v1276
    %v1278 = vadd.s32 %v1277, 536870912
    %v1279 = vshrl.u32 %v1278, 30
    %v1280 = vshll.u32 %v1279, 30
    %v1281 = vsub.s32 %v1277, %v1280
    %vm1282 = vcmp.lt.s32.totalorder %v1281, 0
    %v1283 = vsub.s32 0, %v1281
    %v1284 = vsel %vm1282, %v1283, %v1281
    %v1285 = vclz %v1284
    %v1286 = vsub.s32 %v1285, 2
    %vm1287 = vcmp.gt.s32.totalorder 0, %v1286
    %v1288 = vsel %vm1287, 0, %v1286
    %v1289 = vsub.s32 32, %v1288
    %v1290 = vshll.u32 %v1281, %v1288
    %v1291 = vshrl.u32 %v1273, %v1289
    %v1292 = vor.u32 %v1290, %v1291
    %v1293 = vsub.s32 4294967266, %v1288
    %v1294 = vadd.s32 %v1293, 127
    %v1295 = vshll.u32 %v1294, 23
    %v1296 = vor.u32 4788187, %v1295
    %v1297 = vand.u32 2147483647, %v1296
    %v1299 = vcvt.s32.f32 %v1292
    %v1300 = vmul.f32 %v1299, %v1297
    %v1301 = vxor.u32 %v1300, 2147483648
    %v1302 = vsel %vm1219, %v1301, %v1300
    %v1303 = vsub.s32 4, %v1279
    %v1304 = vsel %vm1219, %v1303, %v1279
    %v1305 = vsel %vm1218, %v779, %v1302
    %v1306 = vsel %vm1218, 0, %v1304
    %v1307 = vcosq.f32.pop %v1305
    %v1308 = vsinq.f32.pop %v1305
    %vm1309 = vweird.f32 %v779
    %v1310 = vand.u32 %v1306, 3
    %vm1311 = vcmp.lt.s32.totalorder %v1310, 2
    %vm1312 = vcmp.eq.s32.totalorder %v1310, 0
    %v1313 = vxor.u32 %v1308, 2147483648
    %v1314 = vsel %vm1312, %v1307, %v1313
    %vm1315 = vcmp.eq.s32.totalorder %v1310, 2
    %v1316 = vxor.u32 %v1307, 2147483648
    %v1317 = vsel %vm1315, %v1316, %v1308
    %v1318 = vsel %vm1311, %v1314, %v1317
    %v1319 = vsel %vm1309, nan, %v1318
    %v1320 = vand.u32 2147483647, %v780
    %vm1321 = vcmp.le.f32.partialorder %v1320, 0.7853982
    %vm1322 = vcmp.lt.s32.totalorder %v780, 0
    %v1323 = vand.u32 %v780, 2139095040
    %v1324 = vshrl.u32 %v1323, 23
    %v1325 = vsub.s32 %v1324, 127
    %v1326 = vand.u32 2147483647, %v780
    %v1327 = vand.u32 %v1326, 8388607
    %v1328 = vor.u32 %v1327, 8388608
    %v1329 = vsub.s32 0, %v1328
    %v1330 = vadd.s32 %v1325, 1
    %vm1331 = vcmp.gt.s32.totalorder %v1330, 0
    %v1332 = vsel %vm1331, %v1330, 0
    %v1333 = vshrl.u32 %v1332, 5
    %v1334 = vand.u32 %v1332, 31
    %v1335 = vsub.s32 32, %v1334
    %v1336 = vshrl.u32 683565275, %v1335
    %v1337 = vshll.u32 683565275, %v1334
    %v1338 = vshrl.u32 2475754826, %v1335
    %v1339 = vor.u32 %v1337, %v1338
    %v1340 = vshll.u32 2475754826, %v1334
    %v1341 = vshrl.u32 2131351028, %v1335
    %v1342 = vor.u32 %v1340, %v1341
    %v1343 = vshll.u32 2131351028, %v1334
    %v1344 = vshrl.u32 2102212464, %v1335
    %v1345 = vor.u32 %v1343, %v1344
    %v1346 = vshll.u32 2102212464, %v1334
    %v1347 = vshrl.u32 920167782, %v1335
    %v1348 = vor.u32 %v1346, %v1347
    %v1349 = vshll.u32 920167782, %v1334
    %v1350 = vshrl.u32 1326507024, %v1335
    %v1351 = vor.u32 %v1349, %v1350
    %vm1352 = vcmp.lt.s32.totalorder %v1333, 1
    %vm1353 = vcmp.lt.s32.totalorder %v1333, 2
    %vm1354 = vcmp.lt.s32.totalorder %v1333, 3
    %vm1355 = vcmp.lt.s32.totalorder %v1333, 4
    %v1356 = vsel %vm1352, %v1336, %v1339
    %v1357 = vsel %vm1355, %v1345, 2102212464
    %v1358 = vsel %vm1354, %v1342, %v1357
    %v1359 = vsel %vm1353, %v1356, %v1358
    %v1360 = vsel %vm1352, %v1339, %v1342
    %v1361 = vsel %vm1355, %v1348, 920167782
    %v1362 = vsel %vm1354, %v1345, %v1361
    %v1363 = vsel %vm1353, %v1360, %v1362
    %v1364 = vsel %vm1352, %v1342, %v1345
    %v1365 = vsel %vm1355, %v1351, 1326507024
    %v1366 = vsel %vm1354, %v1348, %v1365
    %v1367 = vsel %vm1353, %v1364, %v1366
    %v1368 = vshll.u32 %v1328, 8
    %v1369 = vmul.u32.u64.compose %v1368, %v1367
    %v1370 = vextract.low.u32 %v1369
    %v1371 = vextract.high.u32 %v1369
    %v1372 = vmul.u32.u64.compose %v1368, %v1363
    %v1373 = vextract.low.u32 %v1372
    %v1374 = vextract.high.u32 %v1372
    %v1375 = vmul.u32 %v1368, %v1359
    %v1376 = vadd.s32 %v1371, %v1373
    %vm1377 = vc.u32 %v1371, %v1373
    %v1378 = vadd.s32 %v1374, 1
    %v1379 = vsel %vm1377, %v1378, %v1374
    %v1380 = vadd.s32 %v1375, %v1379
    %v1381 = vadd.s32 %v1380, 536870912
    %v1382 = vshrl.u32 %v1381, 30
    %v1383 = vshll.u32 %v1382, 30
    %v1384 = vsub.s32 %v1380, %v1383
    %vm1385 = vcmp.lt.s32.totalorder %v1384, 0
    %v1386 = vsub.s32 0, %v1384
    %v1387 = vsel %vm1385, %v1386, %v1384
    %v1388 = vclz %v1387
    %v1389 = vsub.s32 %v1388, 2
    %vm1390 = vcmp.gt.s32.totalorder 0, %v1389
    %v1391 = vsel %vm1390, 0, %v1389
    %v1392 = vsub.s32 32, %v1391
    %v1393 = vshll.u32 %v1384, %v1391
    %v1394 = vshrl.u32 %v1376, %v1392
    %v1395 = vor.u32 %v1393, %v1394
    %v1396 = vsub.s32 4294967266, %v1391
    %v1397 = vadd.s32 %v1396, 127
    %v1398 = vshll.u32 %v1397, 23
    %v1399 = vor.u32 4788187, %v1398
    %v1400 = vand.u32 2147483647, %v1399
    %v1402 = vcvt.s32.f32 %v1395
    %v1403 = vmul.f32 %v1402, %v1400
    %v1404 = vxor.u32 %v1403, 2147483648
    %v1405 = vsel %vm1322, %v1404, %v1403
    %v1406 = vsub.s32 4, %v1382
    %v1407 = vsel %vm1322, %v1406, %v1382
    %v1408 = vsel %vm1321, %v780, %v1405
    %v1409 = vsel %vm1321, 0, %v1407
    %v1410 = vcosq.f32.pop %v1408
    %v1411 = vsinq.f32.pop %v1408
    %vm1412 = vweird.f32 %v780
    %v1413 = vand.u32 %v1409, 3
    %vm1414 = vcmp.lt.s32.totalorder %v1413, 2
    %vm1415 = vcmp.eq.s32.totalorder %v1413, 0
    %v1416 = vxor.u32 %v1411, 2147483648
    %v1417 = vsel %vm1415, %v1410, %v1416
    %vm1418 = vcmp.eq.s32.totalorder %v1413, 2
    %v1419 = vxor.u32 %v1410, 2147483648
    %v1420 = vsel %vm1418, %v1419, %v1411
    %v1421 = vsel %vm1414, %v1417, %v1420
    %v1422 = vsel %vm1412, nan, %v1421
    %v1423 = vsub.f32 1.0, %v1216
    %v1424 = vsub.f32 1.0, %v1319
    %v1425 = vsub.f32 1.0, %v1422
    %v1426 = vmul.f32 %v1423, %v781
    %v1427 = vmul.f32 %v1424, %v782
    %v1428 = vmul.f32 %v1425, %v783
    %v1429 = vsel %vm769, %v1111, %v1426
    %v1430 = vsel %vm770, %v1112, %v1427
    %v1431 = vsel %vm771, %v1113, %v1428
    %v1432 = vmul.f32 %v1105, %v50
    %v1433 = vmul.f32 %v1106, %v51
    %v1434 = vmul.f32 %v1107, %v52
    %v1435 = vmul.f32 %v1105, %v54
    %v1436 = vmul.f32 %v1106, %v55
    %v1437 = vmul.f32 %v1107, %v56
    %v1438 = vmul.f32 %v1105, %v58
    %v1439 = vmul.f32 %v1106, %v59
    %v1440 = vmul.f32 %v1107, %v60
    %v1441 = vmul.f32 %v50, %v54
    %v1442 = vmul.f32 %v51, %v55
    %v1443 = vmul.f32 %v52, %v56
    %v1444 = vmul.f32 %v1429, %v1441
    %v1445 = vmul.f32 %v1430, %v1442
    %v1446 = vmul.f32 %v1431, %v1443
    %v1447 = vadd.f32 %v64, %v67
    %v1448 = vadd.f32 %v65, %v68
    %v1449 = vadd.f32 %v66, %v69
    %v1450 = vmul.f32 %v736, %v1447
    %v1451 = vmul.f32 %v737, %v1448
    %v1452 = vmul.f32 %v738, %v1449
    %v1453 = vsub.f32 1.0, %v1450
    %v1454 = vsub.f32 1.0, %v1451
    %v1455 = vsub.f32 1.0, %v1452
    %1456 = vrot.lane.b32.xlu0 %v1453, 1
    %v1457 = vpop.permute.xlu0 %1456
    %1458 = vrot.lane.b32.xlu0 %v1454, 1
    %v1459 = vpop.permute.xlu0 %1458
    %1460 = vrot.lane.b32.xlu0 %v1455, 1
    %v1461 = vpop.permute.xlu0 %1460
    %v1462 = vsub.f32 %v1453, %v1457
    %v1463 = vsub.f32 %v1454, %v1459
    %v1464 = vsub.f32 %v1455, %v1461
    %v1465 = vand.u32 2147483647, %v1462
    %v1466 = vand.u32 2147483647, %v1463
    %v1467 = vand.u32 2147483647, %v1464
    %v1468 = vadd.f32 %v757, %v760
    %v1469 = vadd.f32 %v758, %v761
    %v1470 = vadd.f32 %v759, %v762
    %v1471 = vmul.f32 %v1429, %v1468
    %v1472 = vmul.f32 %v1430, %v1469
    %v1473 = vmul.f32 %v1431, %v1470
    %v1474 = vsub.f32 1.0, %v1471
    %v1475 = vsub.f32 1.0, %v1472
    %v1476 = vsub.f32 1.0, %v1473
    %1480 = vrot.lane.b32.xlu0 %v1474, 1
    %v1481 = vpop.permute.xlu0 %1480
    %1482 = vrot.lane.b32.xlu0 %v1475, 1
    %v1483 = vpop.permute.xlu0 %1482
    %1484 = vrot.lane.b32.xlu0 %v1476, 1
    %v1485 = vpop.permute.xlu0 %1484
    %v1489 = vsub.f32 %v1453, %v1481
    %v1490 = vsub.f32 %v1454, %v1483
    %v1491 = vsub.f32 %v1455, %v1485
    %v1492 = vand.u32 2147483647, %v1489
    %v1493 = vand.u32 2147483647, %v1490
    %v1494 = vand.u32 2147483647, %v1491
    %v1495 = vsub.f32 %v751, %v745
    %v1496 = vsub.f32 %v752, %v746
    %v1497 = vsub.f32 %v753, %v747
    %1498 = vrot.lane.b32.xlu0 %v1495, 1
    %v1499 = vpop.permute.xlu0 %1498
    %1500 = vrot.lane.b32.xlu0 %v1496, 1
    %v1501 = vpop.permute.xlu0 %1500
    %1502 = vrot.lane.b32.xlu0 %v1497, 1
    %v1503 = vpop.permute.xlu0 %1502
    %v1504 = vsub.f32 %v1495, %v1499
    %v1505 = vsub.f32 %v1496, %v1501
    %v1506 = vsub.f32 %v1497, %v1503
    %v1507 = vand.u32 2147483647, %v1504
    %v1508 = vand.u32 2147483647, %v1505
    %v1509 = vand.u32 2147483647, %v1506
    %v1510 = vsub.f32 %v1444, %v1438
    %v1511 = vsub.f32 %v1445, %v1439
    %v1512 = vsub.f32 %v1446, %v1440
    %1516 = vrot.lane.b32.xlu0 %v1510, 1
    %v1517 = vpop.permute.xlu0 %1516
    %1518 = vrot.lane.b32.xlu0 %v1511, 1
    %v1519 = vpop.permute.xlu0 %1518
    %1520 = vrot.lane.b32.xlu0 %v1512, 1
    %v1521 = vpop.permute.xlu0 %1520
    %v1525 = vsub.f32 %v1495, %v1517
    %v1526 = vsub.f32 %v1496, %v1519
    %v1527 = vsub.f32 %v1497, %v1521
    %v1528 = vand.u32 2147483647, %v1525
    %v1529 = vand.u32 2147483647, %v1526
    %v1530 = vand.u32 2147483647, %v1527
    %v1531 = vadd.f32 %v1465, %v1507
    %v1532 = vadd.f32 %v1466, %v1508
    %v1533 = vadd.f32 %v1467, %v1509
    %v1534 = vadd.f32 %v1492, %v1528
    %v1535 = vadd.f32 %v1493, %v1529
    %v1536 = vadd.f32 %v1494, %v1530
    %v1537 = vmul.f32 %v39, %v47
    %v1538 = vmul.f32 %v40, %v48
    %v1539 = vmul.f32 %v41, %v49
    %v1540 = vmul.f32 %v736, %v1537
    %v1541 = vmul.f32 %v737, %v1538
    %v1542 = vmul.f32 %v738, %v1539
    %v1543 = vadd.f32 %v1540, %v742
    %v1544 = vadd.f32 %v1541, %v743
    %v1545 = vadd.f32 %v1542, %v744
    %1546 = vrot.lane.b32.xlu0 %v1543, 1
    %v1547 = vpop.permute.xlu0 %1546
    %1548 = vrot.lane.b32.xlu0 %v1544, 1
    %v1549 = vpop.permute.xlu0 %1548
    %1550 = vrot.lane.b32.xlu0 %v1545, 1
    %v1551 = vpop.permute.xlu0 %1550
    %v1552 = vsub.f32 %v1543, %v1547
    %v1553 = vsub.f32 %v1544, %v1549
    %v1554 = vsub.f32 %v1545, %v1551
    %v1555 = vand.u32 2147483647, %v1552
    %v1556 = vand.u32 2147483647, %v1553
    %v1557 = vand.u32 2147483647, %v1554
    %v1558 = vmul.f32 %v50, %v58
    %v1559 = vmul.f32 %v51, %v59
    %v1560 = vmul.f32 %v52, %v60
    %v1561 = vmul.f32 %v1429, %v1558
    %v1562 = vmul.f32 %v1430, %v1559
    %v1563 = vmul.f32 %v1431, %v1560
    %v1564 = vadd.f32 %v1561, %v1435
    %v1565 = vadd.f32 %v1562, %v1436
    %v1566 = vadd.f32 %v1563, %v1437
    %1570 = vrot.lane.b32.xlu0 %v1564, 1
    %v1571 = vpop.permute.xlu0 %1570
    %1572 = vrot.lane.b32.xlu0 %v1565, 1
    %v1573 = vpop.permute.xlu0 %1572
    %1574 = vrot.lane.b32.xlu0 %v1566, 1
    %v1575 = vpop.permute.xlu0 %1574
    %v1579 = vsub.f32 %v1543, %v1571
    %v1580 = vsub.f32 %v1544, %v1573
    %v1581 = vsub.f32 %v1545, %v1575
    %v1582 = vand.u32 2147483647, %v1579
    %v1583 = vand.u32 2147483647, %v1580
    %v1584 = vand.u32 2147483647, %v1581
    %v1585 = vadd.f32 %v1531, %v1555
    %v1586 = vadd.f32 %v1532, %v1556
    %v1587 = vadd.f32 %v1533, %v1557
    %v1588 = vadd.f32 %v1534, %v1582
    %v1589 = vadd.f32 %v1535, %v1583
    %v1590 = vadd.f32 %v1536, %v1584
    %v1591 = vadd.f32 %v751, %v745
    %v1592 = vadd.f32 %v752, %v746
    %v1593 = vadd.f32 %v753, %v747
    %1594 = vrot.lane.b32.xlu0 %v1591, 1
    %v1595 = vpop.permute.xlu0 %1594
    %1596 = vrot.lane.b32.xlu0 %v1592, 1
    %v1597 = vpop.permute.xlu0 %1596
    %1598 = vrot.lane.b32.xlu0 %v1593, 1
    %v1599 = vpop.permute.xlu0 %1598
    %v1600 = vsub.f32 %v1591, %v1595
    %v1601 = vsub.f32 %v1592, %v1597
    %v1602 = vsub.f32 %v1593, %v1599
    %v1603 = vand.u32 2147483647, %v1600
    %v1604 = vand.u32 2147483647, %v1601
    %v1605 = vand.u32 2147483647, %v1602
    %v1606 = vadd.f32 %v1444, %v1438
    %v1607 = vadd.f32 %v1445, %v1439
    %v1608 = vadd.f32 %v1446, %v1440
    %1612 = vrot.lane.b32.xlu0 %v1606, 1
    %v1613 = vpop.permute.xlu0 %1612
    %1614 = vrot.lane.b32.xlu0 %v1607, 1
    %v1615 = vpop.permute.xlu0 %1614
    %1616 = vrot.lane.b32.xlu0 %v1608, 1
    %v1617 = vpop.permute.xlu0 %1616
    %v1621 = vsub.f32 %v1591, %v1613
    %v1622 = vsub.f32 %v1592, %v1615
    %v1623 = vsub.f32 %v1593, %v1617
    %v1624 = vand.u32 2147483647, %v1621
    %v1625 = vand.u32 2147483647, %v1622
    %v1626 = vand.u32 2147483647, %v1623
    %v1627 = vadd.f32 %v1585, %v1603
    %v1628 = vadd.f32 %v1586, %v1604
    %v1629 = vadd.f32 %v1587, %v1605
    %v1630 = vadd.f32 %v1588, %v1624
    %v1631 = vadd.f32 %v1589, %v1625
    %v1632 = vadd.f32 %v1590, %v1626
    %v1633 = vadd.f32 %v61, %v67
    %v1634 = vadd.f32 %v62, %v68
    %v1635 = vadd.f32 %v63, %v69
    %v1636 = vmul.f32 %v736, %v1633
    %v1637 = vmul.f32 %v737, %v1634
    %v1638 = vmul.f32 %v738, %v1635
    %v1639 = vsub.f32 1.0, %v1636
    %v1640 = vsub.f32 1.0, %v1637
    %v1641 = vsub.f32 1.0, %v1638
    %1642 = vrot.lane.b32.xlu0 %v1639, 1
    %v1643 = vpop.permute.xlu0 %1642
    %1644 = vrot.lane.b32.xlu0 %v1640, 1
    %v1645 = vpop.permute.xlu0 %1644
    %1646 = vrot.lane.b32.xlu0 %v1641, 1
    %v1647 = vpop.permute.xlu0 %1646
    %v1648 = vsub.f32 %v1639, %v1643
    %v1649 = vsub.f32 %v1640, %v1645
    %v1650 = vsub.f32 %v1641, %v1647
    %v1651 = vand.u32 2147483647, %v1648
    %v1652 = vand.u32 2147483647, %v1649
    %v1653 = vand.u32 2147483647, %v1650
    %v1654 = vadd.f32 %v754, %v760
    %v1655 = vadd.f32 %v755, %v761
    %v1656 = vadd.f32 %v756, %v762
    %v1657 = vmul.f32 %v1429, %v1654
    %v1658 = vmul.f32 %v1430, %v1655
    %v1659 = vmul.f32 %v1431, %v1656
    %v1660 = vsub.f32 1.0, %v1657
    %v1661 = vsub.f32 1.0, %v1658
    %v1662 = vsub.f32 1.0, %v1659
    %1666 = vrot.lane.b32.xlu0 %v1660, 1
    %v1667 = vpop.permute.xlu0 %1666
    %1668 = vrot.lane.b32.xlu0 %v1661, 1
    %v1669 = vpop.permute.xlu0 %1668
    %1670 = vrot.lane.b32.xlu0 %v1662, 1
    %v1671 = vpop.permute.xlu0 %1670
    %v1675 = vsub.f32 %v1639, %v1667
    %v1676 = vsub.f32 %v1640, %v1669
    %v1677 = vsub.f32 %v1641, %v1671
    %v1678 = vand.u32 2147483647, %v1675
    %v1679 = vand.u32 2147483647, %v1676
    %v1680 = vand.u32 2147483647, %v1677
    %v1681 = vadd.f32 %v1627, %v1651
    %v1682 = vadd.f32 %v1628, %v1652
    %v1683 = vadd.f32 %v1629, %v1653
    %v1684 = vadd.f32 %v1630, %v1678
    %v1685 = vadd.f32 %v1631, %v1679
    %v1686 = vadd.f32 %v1632, %v1680
    %v1687 = vmul.f32 %v43, %v47
    %v1688 = vmul.f32 %v44, %v48
    %v1689 = vmul.f32 %v45, %v49
    %v1690 = vmul.f32 %v736, %v1687
    %v1691 = vmul.f32 %v737, %v1688
    %v1692 = vmul.f32 %v738, %v1689
    %v1693 = vsub.f32 %v1690, %v739
    %v1694 = vsub.f32 %v1691, %v740
    %v1695 = vsub.f32 %v1692, %v741
    %1696 = vrot.lane.b32.xlu0 %v1693, 1
    %v1697 = vpop.permute.xlu0 %1696
    %1698 = vrot.lane.b32.xlu0 %v1694, 1
    %v1699 = vpop.permute.xlu0 %1698
    %1700 = vrot.lane.b32.xlu0 %v1695, 1
    %v1701 = vpop.permute.xlu0 %1700
    %v1702 = vsub.f32 %v1693, %v1697
    %v1703 = vsub.f32 %v1694, %v1699
    %v1704 = vsub.f32 %v1695, %v1701
    %v1705 = vand.u32 2147483647, %v1702
    %v1706 = vand.u32 2147483647, %v1703
    %v1707 = vand.u32 2147483647, %v1704
    %v1708 = vmul.f32 %v54, %v58
    %v1709 = vmul.f32 %v55, %v59
    %v1710 = vmul.f32 %v56, %v60
    %v1711 = vmul.f32 %v1429, %v1708
    %v1712 = vmul.f32 %v1430, %v1709
    %v1713 = vmul.f32 %v1431, %v1710
    %v1714 = vsub.f32 %v1711, %v1432
    %v1715 = vsub.f32 %v1712, %v1433
    %v1716 = vsub.f32 %v1713, %v1434
    %1720 = vrot.lane.b32.xlu0 %v1714, 1
    %v1721 = vpop.permute.xlu0 %1720
    %1722 = vrot.lane.b32.xlu0 %v1715, 1
    %v1723 = vpop.permute.xlu0 %1722
    %1724 = vrot.lane.b32.xlu0 %v1716, 1
    %v1725 = vpop.permute.xlu0 %1724
    %v1729 = vsub.f32 %v1693, %v1721
    %v1730 = vsub.f32 %v1694, %v1723
    %v1731 = vsub.f32 %v1695, %v1725
    %v1732 = vand.u32 2147483647, %v1729
    %v1733 = vand.u32 2147483647, %v1730
    %v1734 = vand.u32 2147483647, %v1731
    %v1735 = vadd.f32 %v1681, %v1705
    %v1736 = vadd.f32 %v1682, %v1706
    %v1737 = vadd.f32 %v1683, %v1707
    %v1738 = vadd.f32 %v1684, %v1732
    %v1739 = vadd.f32 %v1685, %v1733
    %v1740 = vadd.f32 %v1686, %v1734
    %v1741 = vadd.f32 %v1735, %v1736
    %vm1742 = vcmask 1046528
    %v1743 = vsel %vm1742, %v1737, 0.0
    %v1744 = vadd.f32 %v1741, %v1743
    %v1745 = vrot.slane %v1744, 4
    %v1746 = vadd.f32 %v1744, %v1745
    %v1747 = vrot.slane %v1746, 2
    %v1748 = vadd.f32 %v1746, %v1747
    %v1749 = vrot.slane %v1748, 1
    %v1750 = vadd.f32 %v1748, %v1749
    %vm1751 = vcmask 7168
    %v1752 = vsel %vm1751, %v1738, 0.0
    %v1753 = vsel %vm1751, %v1739, 0.0
    %v1754 = vadd.f32 %v1752, %v1753
    %vm1755 = vcmask 6144
    %v1756 = vsel %vm1755, %v1740, 0.0
    %v1757 = vadd.f32 %v1754, %v1756
    %v1758 = vrot.slane %v1757, 4
    %v1759 = vadd.f32 %v1757, %v1758
    %v1760 = vrot.slane %v1759, 2
    %v1761 = vadd.f32 %v1759, %v1760
    %v1762 = vrot.slane %v1761, 1
    %v1763 = vadd.f32 %v1761, %v1762
    %p1764 = scmp.eq.s32.totalorder 0, 0
    %s1765 = scalar_select %p1764, 1, 0
    %v1766 = vstv %s1765
    %vm1767 = vcmp.eq.s32.totalorder %v1766, 1
    %v1768 = vsel %vm1767, 0.0, %v1763
    %v1769 = vlaneseq
    %v1770 = vand.u32 %v1769, 127
    %vm1771 = vcmp.eq.s32.totalorder %v1770, 0
    %1773 = vset.pattern.permute.xlu0 0
    %1774 = vperm.xlu0 %1773, %v1768
    %v1775 = vpop.permute.xlu0 %1774
    %v1777 = vsel %vm1771, %v1775, %v1750
    %1778 = vst [vmem:[#allocation2] sm:$0x1] %v1777
    // Predicated region
    $region10: #{tpu_custom_call.1} parent=1 // pred_check
      _
    $region11: #{tpu_custom_call.1} parent=1 // pred_check_branch
      %1780 = sbr.rel (0) target = $region13
    $region12: #{tpu_custom_call.1} parent=1 // pred_region
      %s1782 = ssub.s32 16, 16
      %1783 = vsyncadd [#allocation3], %s1782
      %s1785 = sshll.u32 [#allocation2], 4
      %s1786 = int_to_ptr.vmem [resolvable:$true] %s1785
      %1788 = dma.vmem_to_hbm [thread:$0]  %s1786, 16, %s2, [#allocation3]
    $region13: #{tpu_custom_call.1} parent=1 // pred_fallthru
      _
    // Predicated region
    $region14: #{tpu_custom_call.1} parent=1 // pred_check
      _
    $region15: #{tpu_custom_call.1} parent=1 // pred_check_branch
      %1790 = sbr.rel (0) target = $region17
    $region16: #{tpu_custom_call.1} parent=1 // pred_region
      %1791 = dma.done [#allocation3], 16
    $region17: #{tpu_custom_call.1} parent=1 // pred_fallthru
      _
    %1792 = vsyncpa [#allocation3], 1

</llo_original>
